<compile_context>
chip_gen: v7x
topology: tpu7x:2x2x1
jax: 0.10.0
libtpu: 0.0.40
codegen_flags: <defaults>
</compile_context>

<pallas_src>
import jax
import jax.numpy as jnp
from jax.experimental import pallas as pl
from jax.experimental.pallas import tpu as pltpu

EPS = 1e-5


# ------------------------------ Fused kernel ----------------------------------
def _dense_layer_kernel(x_ref, s1_ref, t1_ref, w1_ref, s2_ref, t2_ref, w2_ref,
                        o_ref, pad_ref):
    # x_ref  : (1, H*W, Cin)   f32   flattened NHWC rows for this batch element
    # s1/t1  : (1, Cin)        f32   folded BN1 scale / shift
    # w1_ref : (Cin, Cmid)     bf16  1x1 conv weight
    # s2/t2  : (1, Cmid)       f32   folded BN2 scale / shift
    # w2_ref : (9*Cmid, Cout)  bf16  3x3 conv weights packed along K as (ky,kx,cin)
    # o_ref  : (1, H, W, Cout) f32
    # pad_ref: (H+2, W+2, Cmid) f32  VMEM scratch: zero-padded bottleneck activation
    H = o_ref.shape[1]
    W = o_ref.shape[2]
    Cout = o_ref.shape[3]
    Cmid = pad_ref.shape[2]

    # ---- Stage 1: BN1 -> ReLU -> 1x1 conv -> BN2 -> ReLU, into padded scratch ----
    # Scratch is uninitialized; zero it (halo must read as zero for pad=1 conv).
    # Zero every grid step: with "parallel" megacore sharding each core has its
    # own scratch, so a program_id==0 guard would be unsafe.
    pad_ref[...] = jnp.zeros_like(pad_ref)

    x = x_ref[0]                                                 # (H*W, Cin) f32
    xr = jnp.maximum(x * s1_ref[...] + t1_ref[...], 0.0)         # BN1 + ReLU
    y = jnp.dot(xr.astype(jnp.bfloat16), w1_ref[...],
                preferred_element_type=jnp.float32)              # (H*W, Cmid)
    yr = jnp.maximum(y * s2_ref[...] + t2_ref[...], 0.0)         # BN2 + ReLU
    pad_ref[1:H + 1, 1:W + 1, :] = yr.reshape(H, W, Cmid)

    # ---- Stage 2: 3x3 conv (pad=1) as ONE matmul with all 9 taps packed on K ----
    xp = pad_ref[...]                                            # (H+2, W+2, Cmid)
    taps = [xp[ky:ky + H, kx:kx + W, :]                          # (H, W, Cmid) each
            for ky in range(3) for kx in range(3)]
    patch = jnp.concatenate(taps, axis=-1)                       # (H, W, 9*Cmid)
    patch = patch.reshape(H * W, 9 * Cmid).astype(jnp.bfloat16)
    out = jnp.dot(patch, w2_ref[...],
                  preferred_element_type=jnp.float32)            # (H*W, Cout)
    o_ref[0] = out.reshape(H, W, Cout)


# -------------------------------- Wrapper --------------------------------------
def dense_layer_forward(x_nchw, params):
    """x_nchw: (N, Cin, H, W) float32. Returns (N, growth_rate, H, W) float32."""
    (g1, b1, m1, v1, w1_oihw, g2, b2, m2, v2, w2_oihw) = params
    N, Cin, H, W = x_nchw.shape
    Cmid = w1_oihw.shape[0]
    Cout = w2_oihw.shape[0]

    # Layout / parameter glue (no per-pixel compute).
    x_rows = jnp.transpose(x_nchw, (0, 2, 3, 1)).reshape(N, H * W, Cin)  # NHWC rows

    inv1 = jax.lax.rsqrt(v1 + EPS)
    s1 = (g1 * inv1).reshape(1, Cin)
    t1 = (b1 - m1 * g1 * inv1).reshape(1, Cin)
    inv2 = jax.lax.rsqrt(v2 + EPS)
    s2 = (g2 * inv2).reshape(1, Cmid)
    t2 = (b2 - m2 * g2 * inv2).reshape(1, Cmid)

    w1 = jnp.transpose(w1_oihw[:, :, 0, 0], (1, 0)).astype(jnp.bfloat16)   # (Cin, Cmid)
    # (Cout, Cmid, 3, 3) -> (ky, kx, Cmid, Cout) -> (9*Cmid, Cout), row index
    # (ky*3 + kx)*Cmid + cin matches the in-kernel tap concatenation order.
    w2 = jnp.transpose(w2_oihw, (2, 3, 1, 0)).reshape(9 * Cmid, Cout).astype(jnp.bfloat16)

    out_nhwc = pl.pallas_call(
        _dense_layer_kernel,
        out_shape=jax.ShapeDtypeStruct((N, H, W, Cout), jnp.float32),
        grid=(N,),
        in_specs=[
            pl.BlockSpec((1, H * W, Cin), lambda n: (n, 0, 0)),
            pl.BlockSpec((1, Cin), lambda n: (0, 0)),
            pl.BlockSpec((1, Cin), lambda n: (0, 0)),
            pl.BlockSpec((Cin, Cmid), lambda n: (0, 0)),
            pl.BlockSpec((1, Cmid), lambda n: (0, 0)),
            pl.BlockSpec((1, Cmid), lambda n: (0, 0)),
            pl.BlockSpec((9 * Cmid, Cout), lambda n: (0, 0)),
        ],
        out_specs=pl.BlockSpec((1, H, W, Cout), lambda n: (n, 0, 0, 0)),
        scratch_shapes=[pltpu.VMEM((H + 2, W + 2, Cmid), jnp.float32)],
        compiler_params=pltpu.CompilerParams(dimension_semantics=("parallel",)),
    )(x_rows, s1, t1, w1, s2, t2, w2)

    # drop_rate = 0.0 (and eval mode) => dropout is identity.
    # TODO(synk): training-mode dropout with drop_rate > 0 would need pltpu PRNG.
    return jnp.transpose(out_nhwc, (0, 3, 1, 2))   # back to NCHW


# ----------------------- Pure-JAX reference (for checking) ---------------------
def dense_layer_reference(x, params):
    (g1, b1, m1, v1, w1, g2, b2, m2, v2, w2) = params
    bn = lambda t, g, b, m, v: (t - m[None, :, None, None]) \
        * jax.lax.rsqrt(v[None, :, None, None] + EPS) \
        * g[None, :, None, None] + b[None, :, None, None]
    xr = jnp.maximum(bn(x, g1, b1, m1, v1), 0.0)
    y = jax.lax.conv_general_dilated(xr, w1, (1, 1), "VALID",
                                     dimension_numbers=("NCHW", "OIHW", "NCHW"))
    yr = jnp.maximum(bn(y, g2, b2, m2, v2), 0.0)
    out = jax.lax.conv_general_dilated(yr, w2, (1, 1), "SAME",
                                       dimension_numbers=("NCHW", "OIHW", "NCHW"))
    return out


if __name__ == "__main__":
    # Small _DenseLayer config.
    num_input_features = 8
    growth_rate = 8
    bn_size = 4
    Cmid = bn_size * growth_rate        # 32
    N, H, W = 2, 16, 16

    key = jax.random.PRNGKey(0)
    keys = jax.random.split(key, 12)

    x = jax.random.normal(keys[0], (N, num_input_features, H, W), jnp.float32)

    # Deterministic parameter init (BatchNorm running stats + affine, conv weights).
    g1 = 1.0 + 0.1 * jax.random.normal(keys[1], (num_input_features,), jnp.float32)
    b1 = 0.1 * jax.random.normal(keys[2], (num_input_features,), jnp.float32)
    m1 = 0.1 * jax.random.normal(keys[3], (num_input_features,), jnp.float32)
    v1 = jnp.abs(jax.random.normal(keys[4], (num_input_features,), jnp.float32)) + 0.5
    w1 = 0.1 * jax.random.normal(keys[5], (Cmid, num_input_features, 1, 1), jnp.float32)
    g2 = 1.0 + 0.1 * jax.random.normal(keys[6], (Cmid,), jnp.float32)
    b2 = 0.1 * jax.random.normal(keys[7], (Cmid,), jnp.float32)
    m2 = 0.1 * jax.random.normal(keys[8], (Cmid,), jnp.float32)
    v2 = jnp.abs(jax.random.normal(keys[9], (Cmid,), jnp.float32)) + 0.5
    w2 = 0.1 * jax.random.normal(keys[10], (growth_rate, Cmid, 3, 3), jnp.float32)

    params = (g1, b1, m1, v1, w1, g2, b2, m2, v2, w2)

    out = jax.block_until_ready(dense_layer_forward(x, params))
    ref = jax.block_until_ready(dense_layer_reference(x, params))

    assert out.shape == (N, growth_rate, H, W), out.shape
    # bf16 MXU operands (activations + weights) => tolerance looser than pure f32.
    max_err = float(jnp.max(jnp.abs(out - ref)))
    assert max_err < 5e-2, f"max abs error {max_err}"

    print("KERNEL_OK")
</pallas_src>

<mosaic_0001>
module attributes {stable_mosaic.version = 11 : i64} {
  func.func @_dense_layer_kernel(%arg0: i32, %arg1: memref<1x256x8xf32, #tpu.memory_space<vmem>>, %arg2: memref<1x8xf32, #tpu.memory_space<vmem>>, %arg3: memref<1x8xf32, #tpu.memory_space<vmem>>, %arg4: memref<8x32xbf16, #tpu.memory_space<vmem>>, %arg5: memref<1x32xf32, #tpu.memory_space<vmem>>, %arg6: memref<1x32xf32, #tpu.memory_space<vmem>>, %arg7: memref<288x8xbf16, #tpu.memory_space<vmem>>, %arg8: memref<1x16x16x8xf32, #tpu.memory_space<vmem>>, %arg9: memref<18x18x32xf32, #tpu.memory_space<vmem>>) attributes {dimension_semantics = [#tpu.dimension_semantics<parallel>], iteration_bounds = array<i64: 2>, scalar_prefetch = 0 : i64, scratch_operands = 1 : i64, tpu.core_type = #tpu.core_type<tc>, window_params = [{transform_indices = @transform_0, window_bounds = array<i64: 1, 256, 8>}, {pipeline_mode = #tpu.pipeline_mode<synchronous>, transform_indices = @transform_1, window_bounds = array<i64: 1, 8>}, {pipeline_mode = #tpu.pipeline_mode<synchronous>, transform_indices = @transform_2, window_bounds = array<i64: 1, 8>}, {pipeline_mode = #tpu.pipeline_mode<synchronous>, transform_indices = @transform_3, window_bounds = array<i64: 8, 32>}, {pipeline_mode = #tpu.pipeline_mode<synchronous>, transform_indices = @transform_4, window_bounds = array<i64: 1, 32>}, {pipeline_mode = #tpu.pipeline_mode<synchronous>, transform_indices = @transform_5, window_bounds = array<i64: 1, 32>}, {pipeline_mode = #tpu.pipeline_mode<synchronous>, transform_indices = @transform_6, window_bounds = array<i64: 288, 8>}, {transform_indices = @transform_7, window_bounds = array<i64: 1, 16, 16, 8>}]} {
    %cst = arith.constant 0.000000e+00 : f32
    %0 = vector.broadcast %cst : f32 to vector<18x18x32xf32>
    %c0 = arith.constant 0 : index
    %c0_0 = arith.constant 0 : index
    %c0_1 = arith.constant 0 : index
    %1 = vector.load %arg9[%c0, %c0_0, %c0_1] : memref<18x18x32xf32, #tpu.memory_space<vmem>>, vector<18x18x32xf32>
    tpu.vector_store %arg9[%c0, %c0_0, %c0_1], %0 {strides = array<i32>} : memref<18x18x32xf32, #tpu.memory_space<vmem>>, vector<18x18x32xf32>,
    %c0_2 = arith.constant 0 : index
    %c0_3 = arith.constant 0 : index
    %c0_4 = arith.constant 0 : index
    %2 = vector.load %arg1[%c0_2, %c0_3, %c0_4] : memref<1x256x8xf32, #tpu.memory_space<vmem>>, vector<1x256x8xf32>
    %3 = vector.shape_cast %2 : vector<1x256x8xf32> to vector<256x8xf32>
    %c0_5 = arith.constant 0 : index
    %c0_6 = arith.constant 0 : index
    %4 = vector.load %arg2[%c0_5, %c0_6] : memref<1x8xf32, #tpu.memory_space<vmem>>, vector<1x8xf32>
    %5 = vector.broadcast %4 : vector<1x8xf32> to vector<256x8xf32>
    %6 = arith.mulf %3, %5 : vector<256x8xf32>
    %c0_7 = arith.constant 0 : index
    %c0_8 = arith.constant 0 : index
    %7 = vector.load %arg3[%c0_7, %c0_8] : memref<1x8xf32, #tpu.memory_space<vmem>>, vector<1x8xf32>
    %8 = vector.broadcast %7 : vector<1x8xf32> to vector<256x8xf32>
    %9 = arith.addf %6, %8 : vector<256x8xf32>
    %cst_9 = arith.constant 0.000000e+00 : f32
    %10 = vector.broadcast %cst_9 : f32 to vector<256x8xf32>
    %11 = arith.maximumf %9, %10 : vector<256x8xf32>
    %12 = arith.truncf %11 : vector<256x8xf32> to vector<256x8xbf16>
    %c0_10 = arith.constant 0 : index
    %c0_11 = arith.constant 0 : index
    %13 = vector.load %arg4[%c0_10, %c0_11] : memref<8x32xbf16, #tpu.memory_space<vmem>>, vector<8x32xbf16>
    %cst_12 = arith.constant dense<0.000000e+00> : vector<256x32xf32>
    %14 = tpu.matmul %12, %13, %cst_12 {dimension_numbers = #tpu.dot_dimension_numbers<[1], [0], [0], [1], [0, 0, 1, 1], [], []>} : vector<256x8xbf16>, vector<8x32xbf16>, vector<256x32xf32> -> vector<256x32xf32>
    %c0_13 = arith.constant 0 : index
    %c0_14 = arith.constant 0 : index
    %15 = vector.load %arg5[%c0_13, %c0_14] : memref<1x32xf32, #tpu.memory_space<vmem>>, vector<1x32xf32>
    %16 = vector.broadcast %15 : vector<1x32xf32> to vector<256x32xf32>
    %17 = arith.mulf %14, %16 : vector<256x32xf32>
    %c0_15 = arith.constant 0 : index
    %c0_16 = arith.constant 0 : index
    %18 = vector.load %arg6[%c0_15, %c0_16] : memref<1x32xf32, #tpu.memory_space<vmem>>, vector<1x32xf32>
    %19 = vector.broadcast %18 : vector<1x32xf32> to vector<256x32xf32>
    %20 = arith.addf %17, %19 : vector<256x32xf32>
    %cst_17 = arith.constant 0.000000e+00 : f32
    %21 = vector.broadcast %cst_17 : f32 to vector<256x32xf32>
    %22 = arith.maximumf %20, %21 : vector<256x32xf32>
    %23 = vector.shape_cast %22 : vector<256x32xf32> to vector<16x16x32xf32>
    %c1 = arith.constant 1 : index
    %c1_18 = arith.constant 1 : index
    %c0_19 = arith.constant 0 : index
    %24 = vector.load %arg9[%c1, %c1_18, %c0_19] : memref<18x18x32xf32, #tpu.memory_space<vmem>>, vector<16x16x32xf32>
    tpu.vector_store %arg9[%c1, %c1_18, %c0_19], %23 {strides = array<i32>} : memref<18x18x32xf32, #tpu.memory_space<vmem>>, vector<16x16x32xf32>,
    %c0_20 = arith.constant 0 : index
    %c0_21 = arith.constant 0 : index
    %c0_22 = arith.constant 0 : index
    %25 = vector.load %arg9[%c0_20, %c0_21, %c0_22] : memref<18x18x32xf32, #tpu.memory_space<vmem>>, vector<18x18x32xf32>
    %26 = vector.extract_strided_slice %25 {offsets = [0, 0, 0], sizes = [16, 16, 32], strides = [1, 1, 1]} : vector<18x18x32xf32> to vector<16x16x32xf32>
    %27 = vector.extract_strided_slice %25 {offsets = [0, 1, 0], sizes = [16, 16, 32], strides = [1, 1, 1]} : vector<18x18x32xf32> to vector<16x16x32xf32>
    %28 = vector.extract_strided_slice %25 {offsets = [0, 2, 0], sizes = [16, 16, 32], strides = [1, 1, 1]} : vector<18x18x32xf32> to vector<16x16x32xf32>
    %29 = vector.extract_strided_slice %25 {offsets = [1, 0, 0], sizes = [16, 16, 32], strides = [1, 1, 1]} : vector<18x18x32xf32> to vector<16x16x32xf32>
    %30 = vector.extract_strided_slice %25 {offsets = [1, 1, 0], sizes = [16, 16, 32], strides = [1, 1, 1]} : vector<18x18x32xf32> to vector<16x16x32xf32>
    %31 = vector.extract_strided_slice %25 {offsets = [1, 2, 0], sizes = [16, 16, 32], strides = [1, 1, 1]} : vector<18x18x32xf32> to vector<16x16x32xf32>
    %32 = vector.extract_strided_slice %25 {offsets = [2, 0, 0], sizes = [16, 16, 32], strides = [1, 1, 1]} : vector<18x18x32xf32> to vector<16x16x32xf32>
    %33 = vector.extract_strided_slice %25 {offsets = [2, 1, 0], sizes = [16, 16, 32], strides = [1, 1, 1]} : vector<18x18x32xf32> to vector<16x16x32xf32>
    %34 = vector.extract_strided_slice %25 {offsets = [2, 2, 0], sizes = [16, 16, 32], strides = [1, 1, 1]} : vector<18x18x32xf32> to vector<16x16x32xf32>
    %35 = tpu.concatenate %26, %27, %28, %29, %30, %31, %32, %33, %34 in 2 : vector<16x16x32xf32>, vector<16x16x32xf32>, vector<16x16x32xf32>, vector<16x16x32xf32>, vector<16x16x32xf32>, vector<16x16x32xf32>, vector<16x16x32xf32>, vector<16x16x32xf32>, vector<16x16x32xf32> -> vector<16x16x288xf32>
    %36 = vector.shape_cast %35 : vector<16x16x288xf32> to vector<256x288xf32>
    %37 = arith.truncf %36 : vector<256x288xf32> to vector<256x288xbf16>
    %c0_23 = arith.constant 0 : index
    %c0_24 = arith.constant 0 : index
    %38 = vector.load %arg7[%c0_23, %c0_24] : memref<288x8xbf16, #tpu.memory_space<vmem>>, vector<288x8xbf16>
    %cst_25 = arith.constant dense<0.000000e+00> : vector<256x8xf32>
    %39 = tpu.matmul %37, %38, %cst_25 {dimension_numbers = #tpu.dot_dimension_numbers<[1], [0], [0], [1], [0, 0, 1, 1], [], []>} : vector<256x288xbf16>, vector<288x8xbf16>, vector<256x8xf32> -> vector<256x8xf32>
    %40 = vector.shape_cast %39 : vector<256x8xf32> to vector<16x16x8xf32>
    %c0_26 = arith.constant 0 : index
    %c0_27 = arith.constant 0 : index
    %c0_28 = arith.constant 0 : index
    %c0_29 = arith.constant 0 : index
    %41 = vector.load %arg8[%c0_26, %c0_27, %c0_28, %c0_29] : memref<1x16x16x8xf32, #tpu.memory_space<vmem>>, vector<1x16x16x8xf32>
    %42 = vector.shape_cast %41 : vector<1x16x16x8xf32> to vector<16x16x8xf32>
    %43 = vector.shape_cast %40 : vector<16x16x8xf32> to vector<1x16x16x8xf32>
    tpu.vector_store %arg8[%c0_26, %c0_27, %c0_28, %c0_29], %43 {strides = array<i32>} : memref<1x16x16x8xf32, #tpu.memory_space<vmem>>, vector<1x16x16x8xf32>,
    return
  }
  func.func @transform_0(%arg0: i32) -> (i32, i32, i32) {
    %c0_i32 = arith.constant 0 : i32
    %c0_i32_0 = arith.constant 0 : i32
    %c0_i32_1 = arith.constant 0 : i32
    return %arg0, %c0_i32, %c0_i32_0 : i32, i32, i32
  }
  func.func @transform_1(%arg0: i32) -> (i32, i32) {
    %c0_i32 = arith.constant 0 : i32
    %c0_i32_0 = arith.constant 0 : i32
    %c0_i32_1 = arith.constant 0 : i32
    return %c0_i32, %c0_i32_0 : i32, i32
  }
  func.func @transform_2(%arg0: i32) -> (i32, i32) {
    %c0_i32 = arith.constant 0 : i32
    %c0_i32_0 = arith.constant 0 : i32
    %c0_i32_1 = arith.constant 0 : i32
    return %c0_i32, %c0_i32_0 : i32, i32
  }
  func.func @transform_3(%arg0: i32) -> (i32, i32) {
    %c0_i32 = arith.constant 0 : i32
    %c0_i32_0 = arith.constant 0 : i32
    %c0_i32_1 = arith.constant 0 : i32
    return %c0_i32, %c0_i32_0 : i32, i32
  }
  func.func @transform_4(%arg0: i32) -> (i32, i32) {
    %c0_i32 = arith.constant 0 : i32
    %c0_i32_0 = arith.constant 0 : i32
    %c0_i32_1 = arith.constant 0 : i32
    return %c0_i32, %c0_i32_0 : i32, i32
  }
  func.func @transform_5(%arg0: i32) -> (i32, i32) {
    %c0_i32 = arith.constant 0 : i32
    %c0_i32_0 = arith.constant 0 : i32
    %c0_i32_1 = arith.constant 0 : i32
    return %c0_i32, %c0_i32_0 : i32, i32
  }
  func.func @transform_6(%arg0: i32) -> (i32, i32) {
    %c0_i32 = arith.constant 0 : i32
    %c0_i32_0 = arith.constant 0 : i32
    %c0_i32_1 = arith.constant 0 : i32
    return %c0_i32, %c0_i32_0 : i32, i32
  }
  func.func @transform_7(%arg0: i32) -> (i32, i32, i32, i32) {
    %c0_i32 = arith.constant 0 : i32
    %c0_i32_0 = arith.constant 0 : i32
    %c0_i32_1 = arith.constant 0 : i32
    %c0_i32_2 = arith.constant 0 : i32
    return %arg0, %c0_i32, %c0_i32_0, %c0_i32_1 : i32, i32, i32, i32
  }
}

</mosaic_0001>

<llo_original>
// kernel: tpu_custom_call.1
$region0: #{tpu_custom_call.1}
  #allocation0 [shape = 'u32[]', space=smem, size = 0x4, offset = 0x4, fixed_abs, tag = 'smem constant byte address 0x4 - core index']
  #allocation1 [shape = 'u32[144,128]{1,0:T(1,128)}', space=vmem, size = 0x12000, scoped, tag = 'internal scratch']
  #allocation2 [shape = 'f32[18,18,32]{2,1,0:T(8,128)}', space=vmem, size = 0x36000, scoped, tag = 'scratch operand']
  %s0 = inlined_call_operand.vmem [shape: f32[2,256,8], index: 0, kind: input, shape index: {}]
  %s1 = inlined_call_operand.vmem [shape: f32[1,8], index: 1, kind: input, shape index: {}]
  %s2 = inlined_call_operand.vmem [shape: f32[1,8], index: 2, kind: input, shape index: {}]
  %s3 = inlined_call_operand.vmem [shape: bf16[8,32], index: 3, kind: input, shape index: {}]
  %s4 = inlined_call_operand.vmem [shape: f32[1,32], index: 4, kind: input, shape index: {}]
  %s5 = inlined_call_operand.vmem [shape: f32[1,32], index: 5, kind: input, shape index: {}]
  %s6 = inlined_call_operand.vmem [shape: bf16[288,8], index: 6, kind: input, shape index: {}]
  %s7 = inlined_call_operand.vmem [shape: f32[2,16,16,8], index: 7, kind: output, shape index: {}]
  %s8 = sld [smem:[#allocation0]]
  $region61: #{tpu_custom_call.1} parent=0
    _
  %s10 = ssub.s32 1, %s8
  %s11 = scalar_select 0, %s10, %s8
  loop: start=0, step=1, limit=4
  $region2: #{tpu_custom_call.1} parent=0 // loop_pre_header
    _
  $region3: #{tpu_custom_call.1} parent=0 // loop_header
    %s13 = sphi 0, %s17
    %p14 = scmp.ge.s32.totalorder %s13, 4
    %s23 = sphi 0, %s25
    %s26 = sphi 0, %s23
    %s27 = sphi 0, %s26
    %s43 = sphi 0, %s27
    %s47 = sphi 0, %s47
    %s49 = sphi 0, %s47
    %s50 = sphi 0, %s49
    %s64 = sphi 0, %s50
    %s68 = sphi 0, %s68
    %s70 = sphi 0, %s68
    %s71 = sphi 0, %s70
    %s85 = sphi 0, %s71
    %s89 = sphi 0, %s89
    %s91 = sphi 0, %s89
    %s92 = sphi 0, %s91
    %s106 = sphi 0, %s92
    %s110 = sphi 0, %s110
    %s112 = sphi 0, %s110
    %s113 = sphi 0, %s112
    %s127 = sphi 0, %s113
    %s131 = sphi 0, %s131
    %s133 = sphi 0, %s131
    %s134 = sphi 0, %s133
    %s148 = sphi 0, %s134
    %s152 = sphi 0, %s152
    %s154 = sphi 0, %s152
    %s155 = sphi 0, %s154
    %s169 = sphi 0, %s155
    %s175 = sphi 0, %s177
    %s178 = sphi 0, %s175
    %s179 = sphi 0, %s178
    %s195 = sphi 0, %s179
  $region4: #{tpu_custom_call.1} parent=0 // loop_header_branch
    %16 = sbr.rel (%p14) target = $region8
  $region5: #{tpu_custom_call.1} parent=0 // loop_body
    %s18 = ssub.s32 %s13, 1
    %s19 = ssub.s32 %s13, 2
    %s20 = sadd.s32 %s13, 1
    %s21 = ssub.s32 %s13, %s20
    %p22 = scmp.eq.s32.totalorder %s21, 0
    %s24 = sadd.s32 %s23, 1
    %s25 = scalar_select %p22, %s23, %s24
    %p28 = pneg %p22
    %p29 = scmp.eq.s32.totalorder %s13, 1
    %p30 = por %p28, %p29
    %p31 = scmp.ne.s32.totalorder %s23, %s26
    %p32 = scmp.eq.s32.totalorder %s13, 0
    %p33 = por %p31, %p32
    %p34 = scmp.ne.s32.totalorder %s23, %s26
    %p35 = scmp.eq.s32.totalorder %s18, 1
    %p36 = por %p34, %p35
    %p37 = scmp.ne.s32.totalorder %s26, %s27
    %p38 = scmp.eq.s32.totalorder %s18, 0
    %p39 = por %p37, %p38
    %p40 = scmp.ne.s32.totalorder %s26, %s27
    %p41 = scmp.eq.s32.totalorder %s19, 1
    %p42 = por %p40, %p41
    %p44 = scmp.ne.s32.totalorder %s27, %s43
    %p45 = scmp.eq.s32.totalorder %s19, 0
    %p46 = por %p44, %p45
    %s48 = sadd.s32 %s47, 1
    %p51 = scmp.eq.s32.totalorder %s13, 1
    %p52 = scmp.ne.s32.totalorder %s47, %s49
    %p53 = scmp.eq.s32.totalorder %s13, 0
    %p54 = por %p52, %p53
    %p55 = scmp.ne.s32.totalorder %s47, %s49
    %p56 = scmp.eq.s32.totalorder %s18, 1
    %p57 = por %p55, %p56
    %p58 = scmp.ne.s32.totalorder %s49, %s50
    %p59 = scmp.eq.s32.totalorder %s18, 0
    %p60 = por %p58, %p59
    %p61 = scmp.ne.s32.totalorder %s49, %s50
    %p62 = scmp.eq.s32.totalorder %s19, 1
    %p63 = por %p61, %p62
    %p65 = scmp.ne.s32.totalorder %s50, %s64
    %p66 = scmp.eq.s32.totalorder %s19, 0
    %p67 = por %p65, %p66
    %s69 = sadd.s32 %s68, 1
    %p72 = scmp.eq.s32.totalorder %s13, 1
    %p73 = scmp.ne.s32.totalorder %s68, %s70
    %p74 = scmp.eq.s32.totalorder %s13, 0
    %p75 = por %p73, %p74
    %p76 = scmp.ne.s32.totalorder %s68, %s70
    %p77 = scmp.eq.s32.totalorder %s18, 1
    %p78 = por %p76, %p77
    %p79 = scmp.ne.s32.totalorder %s70, %s71
    %p80 = scmp.eq.s32.totalorder %s18, 0
    %p81 = por %p79, %p80
    %p82 = scmp.ne.s32.totalorder %s70, %s71
    %p83 = scmp.eq.s32.totalorder %s19, 1
    %p84 = por %p82, %p83
    %p86 = scmp.ne.s32.totalorder %s71, %s85
    %p87 = scmp.eq.s32.totalorder %s19, 0
    %p88 = por %p86, %p87
    %s90 = sadd.s32 %s89, 1
    %p93 = scmp.eq.s32.totalorder %s13, 1
    %p94 = scmp.ne.s32.totalorder %s89, %s91
    %p95 = scmp.eq.s32.totalorder %s13, 0
    %p96 = por %p94, %p95
    %p97 = scmp.ne.s32.totalorder %s89, %s91
    %p98 = scmp.eq.s32.totalorder %s18, 1
    %p99 = por %p97, %p98
    %p100 = scmp.ne.s32.totalorder %s91, %s92
    %p101 = scmp.eq.s32.totalorder %s18, 0
    %p102 = por %p100, %p101
    %p103 = scmp.ne.s32.totalorder %s91, %s92
    %p104 = scmp.eq.s32.totalorder %s19, 1
    %p105 = por %p103, %p104
    %p107 = scmp.ne.s32.totalorder %s92, %s106
    %p108 = scmp.eq.s32.totalorder %s19, 0
    %p109 = por %p107, %p108
    %s111 = sadd.s32 %s110, 1
    %p114 = scmp.eq.s32.totalorder %s13, 1
    %p115 = scmp.ne.s32.totalorder %s110, %s112
    %p116 = scmp.eq.s32.totalorder %s13, 0
    %p117 = por %p115, %p116
    %p118 = scmp.ne.s32.totalorder %s110, %s112
    %p119 = scmp.eq.s32.totalorder %s18, 1
    %p120 = por %p118, %p119
    %p121 = scmp.ne.s32.totalorder %s112, %s113
    %p122 = scmp.eq.s32.totalorder %s18, 0
    %p123 = por %p121, %p122
    %p124 = scmp.ne.s32.totalorder %s112, %s113
    %p125 = scmp.eq.s32.totalorder %s19, 1
    %p126 = por %p124, %p125
    %p128 = scmp.ne.s32.totalorder %s113, %s127
    %p129 = scmp.eq.s32.totalorder %s19, 0
    %p130 = por %p128, %p129
    %s132 = sadd.s32 %s131, 1
    %p135 = scmp.eq.s32.totalorder %s13, 1
    %p136 = scmp.ne.s32.totalorder %s131, %s133
    %p137 = scmp.eq.s32.totalorder %s13, 0
    %p138 = por %p136, %p137
    %p139 = scmp.ne.s32.totalorder %s131, %s133
    %p140 = scmp.eq.s32.totalorder %s18, 1
    %p141 = por %p139, %p140
    %p142 = scmp.ne.s32.totalorder %s133, %s134
    %p143 = scmp.eq.s32.totalorder %s18, 0
    %p144 = por %p142, %p143
    %p145 = scmp.ne.s32.totalorder %s133, %s134
    %p146 = scmp.eq.s32.totalorder %s19, 1
    %p147 = por %p145, %p146
    %p149 = scmp.ne.s32.totalorder %s134, %s148
    %p150 = scmp.eq.s32.totalorder %s19, 0
    %p151 = por %p149, %p150
    %s153 = sadd.s32 %s152, 1
    %p156 = scmp.eq.s32.totalorder %s13, 1
    %p157 = scmp.ne.s32.totalorder %s152, %s154
    %p158 = scmp.eq.s32.totalorder %s13, 0
    %p159 = por %p157, %p158
    %p160 = scmp.ne.s32.totalorder %s152, %s154
    %p161 = scmp.eq.s32.totalorder %s18, 1
    %p162 = por %p160, %p161
    %p163 = scmp.ne.s32.totalorder %s154, %s155
    %p164 = scmp.eq.s32.totalorder %s18, 0
    %p165 = por %p163, %p164
    %p166 = scmp.ne.s32.totalorder %s154, %s155
    %p167 = scmp.eq.s32.totalorder %s19, 1
    %p168 = por %p166, %p167
    %p170 = scmp.ne.s32.totalorder %s155, %s169
    %p171 = scmp.eq.s32.totalorder %s19, 0
    %p172 = por %p170, %p171
    %s173 = ssub.s32 %s13, %s20
    %p174 = scmp.eq.s32.totalorder %s173, 0
    %s176 = sadd.s32 %s175, 1
    %s177 = scalar_select %p174, %s175, %s176
    %p180 = pneg %p174
    %p181 = scmp.eq.s32.totalorder %s13, 1
    %p182 = por %p180, %p181
    %p183 = scmp.ne.s32.totalorder %s175, %s178
    %p184 = scmp.eq.s32.totalorder %s13, 0
    %p185 = por %p183, %p184
    %p186 = scmp.ne.s32.totalorder %s175, %s178
    %p187 = scmp.eq.s32.totalorder %s18, 1
    %p188 = por %p186, %p187
    %p189 = scmp.ne.s32.totalorder %s178, %s179
    %p190 = scmp.eq.s32.totalorder %s18, 0
    %p191 = por %p189, %p190
    %p192 = scmp.ne.s32.totalorder %s178, %s179
    %p193 = scmp.eq.s32.totalorder %s19, 1
    %p194 = por %p192, %p193
    %p196 = scmp.ne.s32.totalorder %s179, %s195
    %p197 = scmp.eq.s32.totalorder %s19, 0
    %p198 = por %p196, %p197
    %p199 = scmp.le.s32.totalorder 1, %s13
    %p200 = scmp.lt.s32.totalorder %s13, 3
    %p201 = pnand %p199, %p200
    %p202 = pneg %p201
    // Predicated region
    $region9: #{tpu_custom_call.1} parent=5 // pred_check
      _
    $region10: #{tpu_custom_call.1} parent=5 // pred_check_branch
      %204 = sbr.rel (%p201) target = $region12
    $region11: #{tpu_custom_call.1} parent=5 // pred_region
      %s205 = ssub.s32 %s13, 1
      // Predicated region
      $region13: #{tpu_custom_call.1} parent=11 // pred_check
        %p206 = pneg %p60
      $region14: #{tpu_custom_call.1} parent=11 // pred_check_branch
        %208 = sbr.rel (%p206) target = $region16
      $region15: #{tpu_custom_call.1} parent=11 // pred_region
        _
      $region16: #{tpu_custom_call.1} parent=11 // pred_fallthru
        _
      // Predicated region
      $region17: #{tpu_custom_call.1} parent=11 // pred_check
        %p209 = pneg %p81
      $region18: #{tpu_custom_call.1} parent=11 // pred_check_branch
        %211 = sbr.rel (%p209) target = $region20
      $region19: #{tpu_custom_call.1} parent=11 // pred_region
        _
      $region20: #{tpu_custom_call.1} parent=11 // pred_fallthru
        _
      // Predicated region
      $region21: #{tpu_custom_call.1} parent=11 // pred_check
        %p212 = pneg %p102
      $region22: #{tpu_custom_call.1} parent=11 // pred_check_branch
        %214 = sbr.rel (%p212) target = $region24
      $region23: #{tpu_custom_call.1} parent=11 // pred_region
        _
      $region24: #{tpu_custom_call.1} parent=11 // pred_fallthru
        _
      // Predicated region
      $region25: #{tpu_custom_call.1} parent=11 // pred_check
        %p215 = pneg %p123
      $region26: #{tpu_custom_call.1} parent=11 // pred_check_branch
        %217 = sbr.rel (%p215) target = $region28
      $region27: #{tpu_custom_call.1} parent=11 // pred_region
        _
      $region28: #{tpu_custom_call.1} parent=11 // pred_fallthru
        _
      // Predicated region
      $region29: #{tpu_custom_call.1} parent=11 // pred_check
        %p218 = pneg %p144
      $region30: #{tpu_custom_call.1} parent=11 // pred_check_branch
        %220 = sbr.rel (%p218) target = $region32
      $region31: #{tpu_custom_call.1} parent=11 // pred_region
        _
      $region32: #{tpu_custom_call.1} parent=11 // pred_fallthru
        _
      // Predicated region
      $region33: #{tpu_custom_call.1} parent=11 // pred_check
        %p221 = pneg %p165
      $region34: #{tpu_custom_call.1} parent=11 // pred_check_branch
        %223 = sbr.rel (%p221) target = $region36
      $region35: #{tpu_custom_call.1} parent=11 // pred_region
        _
      $region36: #{tpu_custom_call.1} parent=11 // pred_fallthru
        _
    $region12: #{tpu_custom_call.1} parent=5 // pred_fallthru
      _
    %p224 = scmp.lt.s32.totalorder %s13, 2
    // Predicated region
    $region37: #{tpu_custom_call.1} parent=5 // pred_check
      %p225 = pneg %p224
    $region38: #{tpu_custom_call.1} parent=5 // pred_check_branch
      %227 = sbr.rel (%p225) target = $region40
    $region39: #{tpu_custom_call.1} parent=5 // pred_region
      // Predicated region
      $region41: #{tpu_custom_call.1} parent=39 // pred_check
        %p228 = pneg %p33
      $region42: #{tpu_custom_call.1} parent=39 // pred_check_branch
        %230 = sbr.rel (%p228) target = $region44
      $region43: #{tpu_custom_call.1} parent=39 // pred_region
        %p231 = scmp.lt.s32.totalorder %s13, 1
        %s232 = scalar_select %p231, %s13, 1
        %s233 = smul.addr %s232, 32
        %s234 = smul.addr %s233, 8
        %s235 = scalar_lea.vmem %s0, %s234
      $region44: #{tpu_custom_call.1} parent=39 // pred_fallthru
        _
    $region40: #{tpu_custom_call.1} parent=5 // pred_fallthru
      _
    %p236 = scmp.le.s32.totalorder 1, %s13
    %p237 = scmp.lt.s32.totalorder %s13, 3
    %p238 = pnand %p236, %p237
    %p239 = pneg %p238
    // Predicated region
    $region45: #{tpu_custom_call.1} parent=5 // pred_check
      _
    $region46: #{tpu_custom_call.1} parent=5 // pred_check_branch
      %241 = sbr.rel (%p238) target = $region48
    $region47: #{tpu_custom_call.1} parent=5 // pred_region
      %s242 = ssub.s32 %s13, 1
      %p243 = scmp.lt.s32.totalorder %s18, 1
      %s244 = scalar_select %p243, %s18, 1
      %s245 = smul.addr %s244, 32
      %s246 = smul.addr %s245, 8
      %s247 = scalar_lea.vmem %s0, %s246
      %p248 = pneg %p39
      %p249 = pneg %p36
      %p250 = pneg %p60
      %p251 = pneg %p57
      %p252 = pneg %p81
      %p253 = pneg %p78
      %p254 = pneg %p102
      %p255 = pneg %p99
      %p256 = pneg %p123
      %p257 = pneg %p120
      %p258 = pneg %p144
      %p259 = pneg %p141
      %p260 = pneg %p165
      %p261 = pneg %p162
      %p262 = pneg %p191
      %p263 = pneg %p188
      %p264 = scmp.lt.s32.totalorder %s18, 1
      %s265 = scalar_select %p264, %s18, 1
      %s266 = smul.addr %s265, 32
      %s267 = smul.addr %s266, 8
      %s268 = scalar_lea.vmem %s7, %s267
      %p269 = scmp.lt.s32.totalorder %s18, 1
      %s270 = scalar_select %p269, %s18, 1
      %s271 = smul.addr %s270, 32
      %s272 = smul.addr %s271, 8
      %s273 = scalar_lea.vmem %s0, %s272
      %p274 = scmp.lt.s32.totalorder %s18, 1
      %s275 = scalar_select %p274, %s18, 1
      %s276 = smul.addr %s275, 32
      %s277 = smul.addr %s276, 8
      %s278 = scalar_lea.vmem %s7, %s277
      %vm280 = vcmask 261120
      %281 = vst.msk [vmem:[#allocation2] sm:$0xff] %vm280, 0.0
      %282 = vst.msk [vmem:[#allocation2 + $0x8] sm:$0xff] %vm280, 0.0
      %vm283 = vcmask 254976
      %284 = vst.msk [vmem:[#allocation2 + $0x10] sm:$0x3] %vm283, 0.0
      %285 = vst.msk [vmem:[#allocation2 + $0x18] sm:$0xff] %vm280, 0.0
      %286 = vst.msk [vmem:[#allocation2 + $0x20] sm:$0xff] %vm280, 0.0
      %287 = vst.msk [vmem:[#allocation2 + $0x28] sm:$0x3] %vm283, 0.0
      %288 = vst.msk [vmem:[#allocation2 + $0x30] sm:$0xff] %vm280, 0.0
      %289 = vst.msk [vmem:[#allocation2 + $0x38] sm:$0xff] %vm280, 0.0
      %290 = vst.msk [vmem:[#allocation2 + $0x40] sm:$0x3] %vm283, 0.0
      %291 = vst.msk [vmem:[#allocation2 + $0x48] sm:$0xff] %vm280, 0.0
      %292 = vst.msk [vmem:[#allocation2 + $0x50] sm:$0xff] %vm280, 0.0
      %293 = vst.msk [vmem:[#allocation2 + $0x58] sm:$0x3] %vm283, 0.0
      %294 = vst.msk [vmem:[#allocation2 + $0x60] sm:$0xff] %vm280, 0.0
      %295 = vst.msk [vmem:[#allocation2 + $0x68] sm:$0xff] %vm280, 0.0
      %296 = vst.msk [vmem:[#allocation2 + $0x70] sm:$0x3] %vm283, 0.0
      %297 = vst.msk [vmem:[#allocation2 + $0x78] sm:$0xff] %vm280, 0.0
      %298 = vst.msk [vmem:[#allocation2 + $0x80] sm:$0xff] %vm280, 0.0
      %299 = vst.msk [vmem:[#allocation2 + $0x88] sm:$0x3] %vm283, 0.0
      %300 = vst.msk [vmem:[#allocation2 + $0x90] sm:$0xff] %vm280, 0.0
      %301 = vst.msk [vmem:[#allocation2 + $0x98] sm:$0xff] %vm280, 0.0
      %302 = vst.msk [vmem:[#allocation2 + $0xa0] sm:$0x3] %vm283, 0.0
      %303 = vst.msk [vmem:[#allocation2 + $0xa8] sm:$0xff] %vm280, 0.0
      %304 = vst.msk [vmem:[#allocation2 + $0xb0] sm:$0xff] %vm280, 0.0
      %305 = vst.msk [vmem:[#allocation2 + $0xb8] sm:$0x3] %vm283, 0.0
      %306 = vst.msk [vmem:[#allocation2 + $0xc0] sm:$0xff] %vm280, 0.0
      %307 = vst.msk [vmem:[#allocation2 + $0xc8] sm:$0xff] %vm280, 0.0
      %308 = vst.msk [vmem:[#allocation2 + $0xd0] sm:$0x3] %vm283, 0.0
      %309 = vst.msk [vmem:[#allocation2 + $0xd8] sm:$0xff] %vm280, 0.0
      %310 = vst.msk [vmem:[#allocation2 + $0xe0] sm:$0xff] %vm280, 0.0
      %311 = vst.msk [vmem:[#allocation2 + $0xe8] sm:$0x3] %vm283, 0.0
      %312 = vst.msk [vmem:[#allocation2 + $0xf0] sm:$0xff] %vm280, 0.0
      %313 = vst.msk [vmem:[#allocation2 + $0xf8] sm:$0xff] %vm280, 0.0
      %314 = vst.msk [vmem:[#allocation2 + $0x100] sm:$0x3] %vm283, 0.0
      %315 = vst.msk [vmem:[#allocation2 + $0x108] sm:$0xff] %vm280, 0.0
      %316 = vst.msk [vmem:[#allocation2 + $0x110] sm:$0xff] %vm280, 0.0
      %317 = vst.msk [vmem:[#allocation2 + $0x118] sm:$0x3] %vm283, 0.0
      %318 = vst.msk [vmem:[#allocation2 + $0x120] sm:$0xff] %vm280, 0.0
      %319 = vst.msk [vmem:[#allocation2 + $0x128] sm:$0xff] %vm280, 0.0
      %320 = vst.msk [vmem:[#allocation2 + $0x130] sm:$0x3] %vm283, 0.0
      %321 = vst.msk [vmem:[#allocation2 + $0x138] sm:$0xff] %vm280, 0.0
      %322 = vst.msk [vmem:[#allocation2 + $0x140] sm:$0xff] %vm280, 0.0
      %323 = vst.msk [vmem:[#allocation2 + $0x148] sm:$0x3] %vm283, 0.0
      %324 = vst.msk [vmem:[#allocation2 + $0x150] sm:$0xff] %vm280, 0.0
      %325 = vst.msk [vmem:[#allocation2 + $0x158] sm:$0xff] %vm280, 0.0
      %326 = vst.msk [vmem:[#allocation2 + $0x160] sm:$0x3] %vm283, 0.0
      %327 = vst.msk [vmem:[#allocation2 + $0x168] sm:$0xff] %vm280, 0.0
      %328 = vst.msk [vmem:[#allocation2 + $0x170] sm:$0xff] %vm280, 0.0
      %329 = vst.msk [vmem:[#allocation2 + $0x178] sm:$0x3] %vm283, 0.0
      %330 = vst.msk [vmem:[#allocation2 + $0x180] sm:$0xff] %vm280, 0.0
      %331 = vst.msk [vmem:[#allocation2 + $0x188] sm:$0xff] %vm280, 0.0
      %332 = vst.msk [vmem:[#allocation2 + $0x190] sm:$0x3] %vm283, 0.0
      %333 = vst.msk [vmem:[#allocation2 + $0x198] sm:$0xff] %vm280, 0.0
      %334 = vst.msk [vmem:[#allocation2 + $0x1a0] sm:$0xff] %vm280, 0.0
      %335 = vst.msk [vmem:[#allocation2 + $0x1a8] sm:$0x3] %vm283, 0.0
      %v336 = vld [vmem:[%s273] sm:$0xff]
      %v337 = vld [vmem:[%s273 + $0x8] sm:$0xff]
      %v338 = vld [vmem:[%s273 + $0x10] sm:$0xff]
      %v339 = vld [vmem:[%s273 + $0x18] sm:$0xff]
      %v340 = vld [vmem:[%s273 + $0x20] sm:$0xff]
      %v341 = vld [vmem:[%s273 + $0x28] sm:$0xff]
      %v342 = vld [vmem:[%s273 + $0x30] sm:$0xff]
      %v343 = vld [vmem:[%s273 + $0x38] sm:$0xff]
      %v344 = vld [vmem:[%s273 + $0x40] sm:$0xff]
      %v345 = vld [vmem:[%s273 + $0x48] sm:$0xff]
      %v346 = vld [vmem:[%s273 + $0x50] sm:$0xff]
      %v347 = vld [vmem:[%s273 + $0x58] sm:$0xff]
      %v348 = vld [vmem:[%s273 + $0x60] sm:$0xff]
      %v349 = vld [vmem:[%s273 + $0x68] sm:$0xff]
      %v350 = vld [vmem:[%s273 + $0x70] sm:$0xff]
      %v351 = vld [vmem:[%s273 + $0x78] sm:$0xff]
      %v352 = vld [vmem:[%s273 + $0x80] sm:$0xff]
      %v353 = vld [vmem:[%s273 + $0x88] sm:$0xff]
      %v354 = vld [vmem:[%s273 + $0x90] sm:$0xff]
      %v355 = vld [vmem:[%s273 + $0x98] sm:$0xff]
      %v356 = vld [vmem:[%s273 + $0xa0] sm:$0xff]
      %v357 = vld [vmem:[%s273 + $0xa8] sm:$0xff]
      %v358 = vld [vmem:[%s273 + $0xb0] sm:$0xff]
      %v359 = vld [vmem:[%s273 + $0xb8] sm:$0xff]
      %v360 = vld [vmem:[%s273 + $0xc0] sm:$0xff]
      %v361 = vld [vmem:[%s273 + $0xc8] sm:$0xff]
      %v362 = vld [vmem:[%s273 + $0xd0] sm:$0xff]
      %v363 = vld [vmem:[%s273 + $0xd8] sm:$0xff]
      %v364 = vld [vmem:[%s273 + $0xe0] sm:$0xff]
      %v365 = vld [vmem:[%s273 + $0xe8] sm:$0xff]
      %v366 = vld [vmem:[%s273 + $0xf0] sm:$0xff]
      %v367 = vld [vmem:[%s273 + $0xf8] sm:$0xff]
      %v368 = vld [vmem:[%s1] sm:$0x1]
      %v370 = vlaneseq
      %v371 = vshrl.u32 %v370, 7
      %v372 = vsub.s32 0, %v371
      %v373 = vrot.slane %v368, %v372
      %v375 = vmul.f32 %v336, %v373
      %v376 = vmul.f32 %v337, %v373
      %v377 = vmul.f32 %v338, %v373
      %v378 = vmul.f32 %v339, %v373
      %v379 = vmul.f32 %v340, %v373
      %v380 = vmul.f32 %v341, %v373
      %v381 = vmul.f32 %v342, %v373
      %v382 = vmul.f32 %v343, %v373
      %v383 = vmul.f32 %v344, %v373
      %v384 = vmul.f32 %v345, %v373
      %v385 = vmul.f32 %v346, %v373
      %v386 = vmul.f32 %v347, %v373
      %v387 = vmul.f32 %v348, %v373
      %v388 = vmul.f32 %v349, %v373
      %v389 = vmul.f32 %v350, %v373
      %v390 = vmul.f32 %v351, %v373
      %v391 = vmul.f32 %v352, %v373
      %v392 = vmul.f32 %v353, %v373
      %v393 = vmul.f32 %v354, %v373
      %v394 = vmul.f32 %v355, %v373
      %v395 = vmul.f32 %v356, %v373
      %v396 = vmul.f32 %v357, %v373
      %v397 = vmul.f32 %v358, %v373
      %v398 = vmul.f32 %v359, %v373
      %v399 = vmul.f32 %v360, %v373
      %v400 = vmul.f32 %v361, %v373
      %v401 = vmul.f32 %v362, %v373
      %v402 = vmul.f32 %v363, %v373
      %v403 = vmul.f32 %v364, %v373
      %v404 = vmul.f32 %v365, %v373
      %v405 = vmul.f32 %v366, %v373
      %v406 = vmul.f32 %v367, %v373
      %v407 = vld [vmem:[%s2] sm:$0x1]
      %v409 = vlaneseq
      %v410 = vshrl.u32 %v409, 7
      %v411 = vsub.s32 0, %v410
      %v412 = vrot.slane %v407, %v411
      %v414 = vadd.f32 %v375, %v412
      %v415 = vadd.f32 %v376, %v412
      %v416 = vadd.f32 %v377, %v412
      %v417 = vadd.f32 %v378, %v412
      %v418 = vadd.f32 %v379, %v412
      %v419 = vadd.f32 %v380, %v412
      %v420 = vadd.f32 %v381, %v412
      %v421 = vadd.f32 %v382, %v412
      %v422 = vadd.f32 %v383, %v412
      %v423 = vadd.f32 %v384, %v412
      %v424 = vadd.f32 %v385, %v412
      %v425 = vadd.f32 %v386, %v412
      %v426 = vadd.f32 %v387, %v412
      %v427 = vadd.f32 %v388, %v412
      %v428 = vadd.f32 %v389, %v412
      %v429 = vadd.f32 %v390, %v412
      %v430 = vadd.f32 %v391, %v412
      %v431 = vadd.f32 %v392, %v412
      %v432 = vadd.f32 %v393, %v412
      %v433 = vadd.f32 %v394, %v412
      %v434 = vadd.f32 %v395, %v412
      %v435 = vadd.f32 %v396, %v412
      %v436 = vadd.f32 %v397, %v412
      %v437 = vadd.f32 %v398, %v412
      %v438 = vadd.f32 %v399, %v412
      %v439 = vadd.f32 %v400, %v412
      %v440 = vadd.f32 %v401, %v412
      %v441 = vadd.f32 %v402, %v412
      %v442 = vadd.f32 %v403, %v412
      %v443 = vadd.f32 %v404, %v412
      %v444 = vadd.f32 %v405, %v412
      %v445 = vadd.f32 %v406, %v412
      %v446 = vmax.f32 %v414, 0.0
      %v447 = vmax.f32 %v415, 0.0
      %v448 = vmax.f32 %v416, 0.0
      %v449 = vmax.f32 %v417, 0.0
      %v450 = vmax.f32 %v418, 0.0
      %v451 = vmax.f32 %v419, 0.0
      %v452 = vmax.f32 %v420, 0.0
      %v453 = vmax.f32 %v421, 0.0
      %v454 = vmax.f32 %v422, 0.0
      %v455 = vmax.f32 %v423, 0.0
      %v456 = vmax.f32 %v424, 0.0
      %v457 = vmax.f32 %v425, 0.0
      %v458 = vmax.f32 %v426, 0.0
      %v459 = vmax.f32 %v427, 0.0
      %v460 = vmax.f32 %v428, 0.0
      %v461 = vmax.f32 %v429, 0.0
      %v462 = vmax.f32 %v430, 0.0
      %v463 = vmax.f32 %v431, 0.0
      %v464 = vmax.f32 %v432, 0.0
      %v465 = vmax.f32 %v433, 0.0
      %v466 = vmax.f32 %v434, 0.0
      %v467 = vmax.f32 %v435, 0.0
      %v468 = vmax.f32 %v436, 0.0
      %v469 = vmax.f32 %v437, 0.0
      %v470 = vmax.f32 %v438, 0.0
      %v471 = vmax.f32 %v439, 0.0
      %v472 = vmax.f32 %v440, 0.0
      %v473 = vmax.f32 %v441, 0.0
      %v474 = vmax.f32 %v442, 0.0
      %v475 = vmax.f32 %v443, 0.0
      %v476 = vmax.f32 %v444, 0.0
      %v477 = vmax.f32 %v445, 0.0
      %v478 = vpack.c.bf16 %v447, %v446
      %v479 = vpack.c.bf16 %v449, %v448
      %v480 = vpack.c.bf16 %v451, %v450
      %v481 = vpack.c.bf16 %v453, %v452
      %v482 = vpack.c.bf16 %v455, %v454
      %v483 = vpack.c.bf16 %v457, %v456
      %v484 = vpack.c.bf16 %v459, %v458
      %v485 = vpack.c.bf16 %v461, %v460
      %v486 = vpack.c.bf16 %v463, %v462
      %v487 = vpack.c.bf16 %v465, %v464
      %v488 = vpack.c.bf16 %v467, %v466
      %v489 = vpack.c.bf16 %v469, %v468
      %v490 = vpack.c.bf16 %v471, %v470
      %v491 = vpack.c.bf16 %v473, %v472
      %v492 = vpack.c.bf16 %v475, %v474
      %v493 = vpack.c.bf16 %v477, %v476
      %v494 = vld [vmem:[%s3] sm:$0xf]
      %vm495 = vcmask 64512
      %v497 = vsel %vm495, %v478, 0
      %v500 = vsel %vm495, %v479, 0
      %v503 = vsel %vm495, %v480, 0
      %v506 = vsel %vm495, %v481, 0
      %v509 = vsel %vm495, %v482, 0
      %v512 = vsel %vm495, %v483, 0
      %v515 = vsel %vm495, %v484, 0
      %v518 = vsel %vm495, %v485, 0
      %v521 = vsel %vm495, %v486, 0
      %v524 = vsel %vm495, %v487, 0
      %v527 = vsel %vm495, %v488, 0
      %v530 = vsel %vm495, %v489, 0
      %v533 = vsel %vm495, %v490, 0
      %v536 = vsel %vm495, %v491, 0
      %v539 = vsel %vm495, %v492, 0
      %v542 = vsel %vm495, %v493, 0
      %vm544 = vcmask 1043456
      %v546 = vsel %vm544, %v494, 0
      %548 = vmatprep.subr.bf16.mxu0 0
      %549 = vmatpush1.bf16.msra.mxu0 %v546
      %550 = vmatprep.subr.bf16.mxu0 0
      %551 = vmatpush1.bf16.msra.mxu0 0
      %552 = vmatprep.subr.bf16.mxu0 0
      %553 = vmatpush1.bf16.msra.mxu0 0
      %554 = vmatprep.subr.bf16.mxu0 0
      %555 = vmatpush1.bf16.msra.mxu0 0
      %556 = vmatprep.subr.bf16.mxu0 0
      %557 = vmatpush1.bf16.msra.mxu0 0
      %558 = vmatprep.subr.bf16.mxu0 0
      %559 = vmatpush1.bf16.msra.mxu0 0
      %560 = vmatprep.subr.bf16.mxu0 0
      %561 = vmatpush1.bf16.msra.mxu0 0
      %562 = vmatprep.subr.bf16.mxu0 0
      %563 = vmatpush1.bf16.msra.mxu0 0
      %564 = vmatprep.subr.bf16.mxu0 0
      %565 = vmatpush1.bf16.msra.mxu0 0
      %566 = vmatprep.subr.bf16.mxu0 0
      %567 = vmatpush1.bf16.msra.mxu0 0
      %568 = vmatprep.subr.bf16.mxu0 0
      %569 = vmatpush1.bf16.msra.mxu0 0
      %570 = vmatprep.subr.bf16.mxu0 0
      %571 = vmatpush1.bf16.msra.mxu0 0
      %572 = vmatprep.subr.bf16.mxu0 0
      %573 = vmatpush1.bf16.msra.mxu0 0
      %574 = vmatprep.subr.bf16.mxu0 0
      %575 = vmatpush1.bf16.msra.mxu0 0
      %576 = vmatprep.subr.bf16.mxu0 0
      %577 = vmatpush1.bf16.msra.mxu0 0
      %578 = vmatprep.subr.bf16.mxu0 0
      %579 = vmatpush1.bf16.msra.mxu0 0
      %580 = vmatprep.mubr.bf16.mxu0 0
      %581 = vmatmul.mubr.bf16.gmra.mrb[0].mxu0 %v497
      %v582 = vpop.f32.mrb[0].mxu0
      %v583 = vadd.f32 0.0, %v582
      %v584 = vpop.f32.mrb[0].mxu0
      %v585 = vpop.f32.mrb[0].mxu0
      %v586 = vadd.f32 0.0, %v585
      %v587 = vpop.f32.mrb[0].mxu0
      %588 = vmatprep.mubr.bf16.mxu0 0
      %589 = vmatmul.mubr.bf16.gmra.mrb[0].mxu0 %v500
      %v590 = vpop.f32.mrb[0].mxu0
      %v591 = vadd.f32 0.0, %v590
      %v592 = vpop.f32.mrb[0].mxu0
      %v593 = vpop.f32.mrb[0].mxu0
      %v594 = vadd.f32 0.0, %v593
      %v595 = vpop.f32.mrb[0].mxu0
      %596 = vmatprep.mubr.bf16.mxu0 0
      %597 = vmatmul.mubr.bf16.gmra.mrb[0].mxu0 %v503
      %v598 = vpop.f32.mrb[0].mxu0
      %v599 = vadd.f32 0.0, %v598
      %v600 = vpop.f32.mrb[0].mxu0
      %v601 = vpop.f32.mrb[0].mxu0
      %v602 = vadd.f32 0.0, %v601
      %v603 = vpop.f32.mrb[0].mxu0
      %604 = vmatprep.mubr.bf16.mxu0 0
      %605 = vmatmul.mubr.bf16.gmra.mrb[0].mxu0 %v506
      %v606 = vpop.f32.mrb[0].mxu0
      %v607 = vadd.f32 0.0, %v606
      %v608 = vpop.f32.mrb[0].mxu0
      %v609 = vpop.f32.mrb[0].mxu0
      %v610 = vadd.f32 0.0, %v609
      %v611 = vpop.f32.mrb[0].mxu0
      %612 = vmatprep.mubr.bf16.mxu0 0
      %613 = vmatmul.mubr.bf16.gmra.mrb[0].mxu0 %v509
      %v614 = vpop.f32.mrb[0].mxu0
      %v615 = vadd.f32 0.0, %v614
      %v616 = vpop.f32.mrb[0].mxu0
      %v617 = vpop.f32.mrb[0].mxu0
      %v618 = vadd.f32 0.0, %v617
      %v619 = vpop.f32.mrb[0].mxu0
      %620 = vmatprep.mubr.bf16.mxu0 0
      %621 = vmatmul.mubr.bf16.gmra.mrb[0].mxu0 %v512
      %v622 = vpop.f32.mrb[0].mxu0
      %v623 = vadd.f32 0.0, %v622
      %v624 = vpop.f32.mrb[0].mxu0
      %v625 = vpop.f32.mrb[0].mxu0
      %v626 = vadd.f32 0.0, %v625
      %v627 = vpop.f32.mrb[0].mxu0
      %628 = vmatprep.mubr.bf16.mxu0 0
      %629 = vmatmul.mubr.bf16.gmra.mrb[0].mxu0 %v515
      %v630 = vpop.f32.mrb[0].mxu0
      %v631 = vadd.f32 0.0, %v630
      %v632 = vpop.f32.mrb[0].mxu0
      %v633 = vpop.f32.mrb[0].mxu0
      %v634 = vadd.f32 0.0, %v633
      %v635 = vpop.f32.mrb[0].mxu0
      %636 = vmatprep.mubr.bf16.mxu0 0
      %637 = vmatmul.mubr.bf16.gmra.mrb[0].mxu0 %v518
      %v638 = vpop.f32.mrb[0].mxu0
      %v639 = vadd.f32 0.0, %v638
      %v640 = vpop.f32.mrb[0].mxu0
      %v641 = vpop.f32.mrb[0].mxu0
      %v642 = vadd.f32 0.0, %v641
      %v643 = vpop.f32.mrb[0].mxu0
      %644 = vmatprep.mubr.bf16.mxu0 0
      %645 = vmatmul.mubr.bf16.gmra.mrb[0].mxu0 %v521
      %v646 = vpop.f32.mrb[0].mxu0
      %v647 = vadd.f32 0.0, %v646
      %v648 = vpop.f32.mrb[0].mxu0
      %v649 = vpop.f32.mrb[0].mxu0
      %v650 = vadd.f32 0.0, %v649
      %v651 = vpop.f32.mrb[0].mxu0
      %652 = vmatprep.mubr.bf16.mxu0 0
      %653 = vmatmul.mubr.bf16.gmra.mrb[0].mxu0 %v524
      %v654 = vpop.f32.mrb[0].mxu0
      %v655 = vadd.f32 0.0, %v654
      %v656 = vpop.f32.mrb[0].mxu0
      %v657 = vpop.f32.mrb[0].mxu0
      %v658 = vadd.f32 0.0, %v657
      %v659 = vpop.f32.mrb[0].mxu0
      %660 = vmatprep.mubr.bf16.mxu0 0
      %661 = vmatmul.mubr.bf16.gmra.mrb[0].mxu0 %v527
      %v662 = vpop.f32.mrb[0].mxu0
      %v663 = vadd.f32 0.0, %v662
      %v664 = vpop.f32.mrb[0].mxu0
      %v665 = vpop.f32.mrb[0].mxu0
      %v666 = vadd.f32 0.0, %v665
      %v667 = vpop.f32.mrb[0].mxu0
      %668 = vmatprep.mubr.bf16.mxu0 0
      %669 = vmatmul.mubr.bf16.gmra.mrb[0].mxu0 %v530
      %v670 = vpop.f32.mrb[0].mxu0
      %v671 = vadd.f32 0.0, %v670
      %v672 = vpop.f32.mrb[0].mxu0
      %v673 = vpop.f32.mrb[0].mxu0
      %v674 = vadd.f32 0.0, %v673
      %v675 = vpop.f32.mrb[0].mxu0
      %676 = vmatprep.mubr.bf16.mxu0 0
      %677 = vmatmul.mubr.bf16.gmra.mrb[0].mxu0 %v533
      %v678 = vpop.f32.mrb[0].mxu0
      %v679 = vadd.f32 0.0, %v678
      %v680 = vpop.f32.mrb[0].mxu0
      %v681 = vpop.f32.mrb[0].mxu0
      %v682 = vadd.f32 0.0, %v681
      %v683 = vpop.f32.mrb[0].mxu0
      %684 = vmatprep.mubr.bf16.mxu0 0
      %685 = vmatmul.mubr.bf16.gmra.mrb[0].mxu0 %v536
      %v686 = vpop.f32.mrb[0].mxu0
      %v687 = vadd.f32 0.0, %v686
      %v688 = vpop.f32.mrb[0].mxu0
      %v689 = vpop.f32.mrb[0].mxu0
      %v690 = vadd.f32 0.0, %v689
      %v691 = vpop.f32.mrb[0].mxu0
      %692 = vmatprep.mubr.bf16.mxu0 0
      %693 = vmatmul.mubr.bf16.gmra.mrb[0].mxu0 %v539
      %v694 = vpop.f32.mrb[0].mxu0
      %v695 = vadd.f32 0.0, %v694
      %v696 = vpop.f32.mrb[0].mxu0
      %v697 = vpop.f32.mrb[0].mxu0
      %v698 = vadd.f32 0.0, %v697
      %v699 = vpop.f32.mrb[0].mxu0
      %700 = vmatprep.mubr.bf16.mxu0 0
      %701 = vmatmul.mubr.bf16.gmra.mrb[0].mxu0 %v542
      %v702 = vpop.f32.mrb[0].mxu0
      %v703 = vadd.f32 0.0, %v702
      %v704 = vpop.f32.mrb[0].mxu0
      %v705 = vpop.f32.mrb[0].mxu0
      %v706 = vadd.f32 0.0, %v705
      %v707 = vpop.f32.mrb[0].mxu0
      %708 = vdwg.mxu0
      %v709 = vld [vmem:[%s4] sm:$0x1]
      %v711 = vlaneseq
      %v712 = vshrl.u32 %v711, 7
      %v713 = vsub.s32 0, %v712
      %v714 = vrot.slane %v709, %v713
      %v716 = vmul.f32 %v583, %v714
      %v717 = vmul.f32 %v586, %v714
      %v718 = vmul.f32 %v591, %v714
      %v719 = vmul.f32 %v594, %v714
      %v720 = vmul.f32 %v599, %v714
      %v721 = vmul.f32 %v602, %v714
      %v722 = vmul.f32 %v607, %v714
      %v723 = vmul.f32 %v610, %v714
      %v724 = vmul.f32 %v615, %v714
      %v725 = vmul.f32 %v618, %v714
      %v726 = vmul.f32 %v623, %v714
      %v727 = vmul.f32 %v626, %v714
      %v728 = vmul.f32 %v631, %v714
      %v729 = vmul.f32 %v634, %v714
      %v730 = vmul.f32 %v639, %v714
      %v731 = vmul.f32 %v642, %v714
      %v732 = vmul.f32 %v647, %v714
      %v733 = vmul.f32 %v650, %v714
      %v734 = vmul.f32 %v655, %v714
      %v735 = vmul.f32 %v658, %v714
      %v736 = vmul.f32 %v663, %v714
      %v737 = vmul.f32 %v666, %v714
      %v738 = vmul.f32 %v671, %v714
      %v739 = vmul.f32 %v674, %v714
      %v740 = vmul.f32 %v679, %v714
      %v741 = vmul.f32 %v682, %v714
      %v742 = vmul.f32 %v687, %v714
      %v743 = vmul.f32 %v690, %v714
      %v744 = vmul.f32 %v695, %v714
      %v745 = vmul.f32 %v698, %v714
      %v746 = vmul.f32 %v703, %v714
      %v747 = vmul.f32 %v706, %v714
      %v748 = vld [vmem:[%s5] sm:$0x1]
      %v750 = vlaneseq
      %v751 = vshrl.u32 %v750, 7
      %v752 = vsub.s32 0, %v751
      %v753 = vrot.slane %v748, %v752
      %v755 = vadd.f32 %v716, %v753
      %v756 = vadd.f32 %v717, %v753
      %v757 = vadd.f32 %v718, %v753
      %v758 = vadd.f32 %v719, %v753
      %v759 = vadd.f32 %v720, %v753
      %v760 = vadd.f32 %v721, %v753
      %v761 = vadd.f32 %v722, %v753
      %v762 = vadd.f32 %v723, %v753
      %v763 = vadd.f32 %v724, %v753
      %v764 = vadd.f32 %v725, %v753
      %v765 = vadd.f32 %v726, %v753
      %v766 = vadd.f32 %v727, %v753
      %v767 = vadd.f32 %v728, %v753
      %v768 = vadd.f32 %v729, %v753
      %v769 = vadd.f32 %v730, %v753
      %v770 = vadd.f32 %v731, %v753
      %v771 = vadd.f32 %v732, %v753
      %v772 = vadd.f32 %v733, %v753
      %v773 = vadd.f32 %v734, %v753
      %v774 = vadd.f32 %v735, %v753
      %v775 = vadd.f32 %v736, %v753
      %v776 = vadd.f32 %v737, %v753
      %v777 = vadd.f32 %v738, %v753
      %v778 = vadd.f32 %v739, %v753
      %v779 = vadd.f32 %v740, %v753
      %v780 = vadd.f32 %v741, %v753
      %v781 = vadd.f32 %v742, %v753
      %v782 = vadd.f32 %v743, %v753
      %v783 = vadd.f32 %v744, %v753
      %v784 = vadd.f32 %v745, %v753
      %v785 = vadd.f32 %v746, %v753
      %v786 = vadd.f32 %v747, %v753
      %v787 = vmax.f32 %v755, 0.0
      %v788 = vmax.f32 %v756, 0.0
      %v789 = vmax.f32 %v757, 0.0
      %v790 = vmax.f32 %v758, 0.0
      %v791 = vmax.f32 %v759, 0.0
      %v792 = vmax.f32 %v760, 0.0
      %v793 = vmax.f32 %v761, 0.0
      %v794 = vmax.f32 %v762, 0.0
      %v795 = vmax.f32 %v763, 0.0
      %v796 = vmax.f32 %v764, 0.0
      %v797 = vmax.f32 %v765, 0.0
      %v798 = vmax.f32 %v766, 0.0
      %v799 = vmax.f32 %v767, 0.0
      %v800 = vmax.f32 %v768, 0.0
      %v801 = vmax.f32 %v769, 0.0
      %v802 = vmax.f32 %v770, 0.0
      %v803 = vmax.f32 %v771, 0.0
      %v804 = vmax.f32 %v772, 0.0
      %v805 = vmax.f32 %v773, 0.0
      %v806 = vmax.f32 %v774, 0.0
      %v807 = vmax.f32 %v775, 0.0
      %v808 = vmax.f32 %v776, 0.0
      %v809 = vmax.f32 %v777, 0.0
      %v810 = vmax.f32 %v778, 0.0
      %v811 = vmax.f32 %v779, 0.0
      %v812 = vmax.f32 %v780, 0.0
      %v813 = vmax.f32 %v781, 0.0
      %v814 = vmax.f32 %v782, 0.0
      %v815 = vmax.f32 %v783, 0.0
      %v816 = vmax.f32 %v784, 0.0
      %v817 = vmax.f32 %v785, 0.0
      %v818 = vmax.f32 %v786, 0.0
      %s819 = scalar_lea.vmem [#allocation2], 24
      %820 = vst.msk [vmem:[%s819 + $0x1] sm:$0xff] %vm280, %v787
      %821 = vst.msk [vmem:[%s819 + $0x9] sm:$0xff] %vm280, %v788
      %822 = vst.msk [vmem:[%s819 + $0x19] sm:$0xff] %vm280, %v789
      %823 = vst.msk [vmem:[%s819 + $0x21] sm:$0xff] %vm280, %v790
      %824 = vst.msk [vmem:[%s819 + $0x31] sm:$0xff] %vm280, %v791
      %825 = vst.msk [vmem:[%s819 + $0x39] sm:$0xff] %vm280, %v792
      %826 = vst.msk [vmem:[%s819 + $0x49] sm:$0xff] %vm280, %v793
      %827 = vst.msk [vmem:[%s819 + $0x51] sm:$0xff] %vm280, %v794
      %828 = vst.msk [vmem:[%s819 + $0x61] sm:$0xff] %vm280, %v795
      %829 = vst.msk [vmem:[%s819 + $0x69] sm:$0xff] %vm280, %v796
      %830 = vst.msk [vmem:[%s819 + $0x79] sm:$0xff] %vm280, %v797
      %831 = vst.msk [vmem:[%s819 + $0x81] sm:$0xff] %vm280, %v798
      %832 = vst.msk [vmem:[%s819 + $0x91] sm:$0xff] %vm280, %v799
      %833 = vst.msk [vmem:[%s819 + $0x99] sm:$0xff] %vm280, %v800
      %834 = vst.msk [vmem:[%s819 + $0xa9] sm:$0xff] %vm280, %v801
      %835 = vst.msk [vmem:[%s819 + $0xb1] sm:$0xff] %vm280, %v802
      %836 = vst.msk [vmem:[%s819 + $0xc1] sm:$0xff] %vm280, %v803
      %837 = vst.msk [vmem:[%s819 + $0xc9] sm:$0xff] %vm280, %v804
      %838 = vst.msk [vmem:[%s819 + $0xd9] sm:$0xff] %vm280, %v805
      %839 = vst.msk [vmem:[%s819 + $0xe1] sm:$0xff] %vm280, %v806
      %840 = vst.msk [vmem:[%s819 + $0xf1] sm:$0xff] %vm280, %v807
      %841 = vst.msk [vmem:[%s819 + $0xf9] sm:$0xff] %vm280, %v808
      %842 = vst.msk [vmem:[%s819 + $0x109] sm:$0xff] %vm280, %v809
      %843 = vst.msk [vmem:[%s819 + $0x111] sm:$0xff] %vm280, %v810
      %844 = vst.msk [vmem:[%s819 + $0x121] sm:$0xff] %vm280, %v811
      %845 = vst.msk [vmem:[%s819 + $0x129] sm:$0xff] %vm280, %v812
      %846 = vst.msk [vmem:[%s819 + $0x139] sm:$0xff] %vm280, %v813
      %847 = vst.msk [vmem:[%s819 + $0x141] sm:$0xff] %vm280, %v814
      %848 = vst.msk [vmem:[%s819 + $0x151] sm:$0xff] %vm280, %v815
      %849 = vst.msk [vmem:[%s819 + $0x159] sm:$0xff] %vm280, %v816
      %850 = vst.msk [vmem:[%s819 + $0x169] sm:$0xff] %vm280, %v817
      %851 = vst.msk [vmem:[%s819 + $0x171] sm:$0xff] %vm280, %v818
      %v852 = vld [vmem:[#allocation2] sm:$0xff]
      %v853 = vld [vmem:[#allocation2 + $0x8] sm:$0xff]
      %v854 = vld [vmem:[#allocation2 + $0x10] sm:$0x3]
      %v855 = vld [vmem:[#allocation2 + $0x18] sm:$0xff]
      %v856 = vld [vmem:[#allocation2 + $0x20] sm:$0xff]
      %v857 = vld [vmem:[#allocation2 + $0x28] sm:$0x3]
      %v858 = vld [vmem:[#allocation2 + $0x30] sm:$0xff]
      %v859 = vld [vmem:[#allocation2 + $0x38] sm:$0xff]
      %v860 = vld [vmem:[#allocation2 + $0x40] sm:$0x3]
      %v861 = vld [vmem:[#allocation2 + $0x48] sm:$0xff]
      %v862 = vld [vmem:[#allocation2 + $0x50] sm:$0xff]
      %v863 = vld [vmem:[#allocation2 + $0x58] sm:$0x3]
      %v864 = vld [vmem:[#allocation2 + $0x60] sm:$0xff]
      %v865 = vld [vmem:[#allocation2 + $0x68] sm:$0xff]
      %v866 = vld [vmem:[#allocation2 + $0x70] sm:$0x3]
      %v867 = vld [vmem:[#allocation2 + $0x78] sm:$0xff]
      %v868 = vld [vmem:[#allocation2 + $0x80] sm:$0xff]
      %v869 = vld [vmem:[#allocation2 + $0x88] sm:$0x3]
      %v870 = vld [vmem:[#allocation2 + $0x90] sm:$0xff]
      %v871 = vld [vmem:[#allocation2 + $0x98] sm:$0xff]
      %v872 = vld [vmem:[#allocation2 + $0xa0] sm:$0x3]
      %v873 = vld [vmem:[#allocation2 + $0xa8] sm:$0xff]
      %v874 = vld [vmem:[#allocation2 + $0xb0] sm:$0xff]
      %v875 = vld [vmem:[#allocation2 + $0xb8] sm:$0x3]
      %v876 = vld [vmem:[#allocation2 + $0xc0] sm:$0xff]
      %v877 = vld [vmem:[#allocation2 + $0xc8] sm:$0xff]
      %v878 = vld [vmem:[#allocation2 + $0xd0] sm:$0x3]
      %v879 = vld [vmem:[#allocation2 + $0xd8] sm:$0xff]
      %v880 = vld [vmem:[#allocation2 + $0xe0] sm:$0xff]
      %v881 = vld [vmem:[#allocation2 + $0xe8] sm:$0x3]
      %v882 = vld [vmem:[#allocation2 + $0xf0] sm:$0xff]
      %v883 = vld [vmem:[#allocation2 + $0xf8] sm:$0xff]
      %v884 = vld [vmem:[#allocation2 + $0x100] sm:$0x3]
      %v885 = vld [vmem:[#allocation2 + $0x108] sm:$0xff]
      %v886 = vld [vmem:[#allocation2 + $0x110] sm:$0xff]
      %v887 = vld [vmem:[#allocation2 + $0x118] sm:$0x3]
      %v888 = vld [vmem:[#allocation2 + $0x120] sm:$0xff]
      %v889 = vld [vmem:[#allocation2 + $0x128] sm:$0xff]
      %v890 = vld [vmem:[#allocation2 + $0x130] sm:$0x3]
      %v891 = vld [vmem:[#allocation2 + $0x138] sm:$0xff]
      %v892 = vld [vmem:[#allocation2 + $0x140] sm:$0xff]
      %v893 = vld [vmem:[#allocation2 + $0x148] sm:$0x3]
      %v894 = vld [vmem:[#allocation2 + $0x150] sm:$0xff]
      %v895 = vld [vmem:[#allocation2 + $0x158] sm:$0xff]
      %v896 = vld [vmem:[#allocation2 + $0x160] sm:$0x3]
      %v897 = vld [vmem:[#allocation2 + $0x168] sm:$0xff]
      %v898 = vld [vmem:[#allocation2 + $0x170] sm:$0xff]
      %v899 = vld [vmem:[#allocation2 + $0x178] sm:$0x3]
      %v900 = vld [vmem:[#allocation2 + $0x180] sm:$0xff]
      %v901 = vld [vmem:[#allocation2 + $0x188] sm:$0xff]
      %v902 = vld [vmem:[#allocation2 + $0x190] sm:$0x3]
      %v903 = vld [vmem:[#allocation2 + $0x198] sm:$0xff]
      %v904 = vld [vmem:[#allocation2 + $0x1a0] sm:$0xff]
      %v905 = vld [vmem:[#allocation2 + $0x1a8] sm:$0x3]
      %vm954 = vcmask 1046528
      %v955 = vrot.slane %v852, 1
      %v956 = vrot.slane %v853, 1
      %v957 = vsel %vm954, %v955, %v956
      %v958 = vrot.slane %v854, 1
      %v959 = vsel %vm954, %v956, %v958
      %v960 = vrot.slane %v855, 1
      %v961 = vrot.slane %v856, 1
      %v962 = vsel %vm954, %v960, %v961
      %v963 = vrot.slane %v857, 1
      %v964 = vsel %vm954, %v961, %v963
      %v965 = vrot.slane %v858, 1
      %v966 = vrot.slane %v859, 1
      %v967 = vsel %vm954, %v965, %v966
      %v968 = vrot.slane %v860, 1
      %v969 = vsel %vm954, %v966, %v968
      %v970 = vrot.slane %v861, 1
      %v971 = vrot.slane %v862, 1
      %v972 = vsel %vm954, %v970, %v971
      %v973 = vrot.slane %v863, 1
      %v974 = vsel %vm954, %v971, %v973
      %v975 = vrot.slane %v864, 1
      %v976 = vrot.slane %v865, 1
      %v977 = vsel %vm954, %v975, %v976
      %v978 = vrot.slane %v866, 1
      %v979 = vsel %vm954, %v976, %v978
      %v980 = vrot.slane %v867, 1
      %v981 = vrot.slane %v868, 1
      %v982 = vsel %vm954, %v980, %v981
      %v983 = vrot.slane %v869, 1
      %v984 = vsel %vm954, %v981, %v983
      %v985 = vrot.slane %v870, 1
      %v986 = vrot.slane %v871, 1
      %v987 = vsel %vm954, %v985, %v986
      %v988 = vrot.slane %v872, 1
      %v989 = vsel %vm954, %v986, %v988
      %v990 = vrot.slane %v873, 1
      %v991 = vrot.slane %v874, 1
      %v992 = vsel %vm954, %v990, %v991
      %v993 = vrot.slane %v875, 1
      %v994 = vsel %vm954, %v991, %v993
      %v995 = vrot.slane %v876, 1
      %v996 = vrot.slane %v877, 1
      %v997 = vsel %vm954, %v995, %v996
      %v998 = vrot.slane %v878, 1
      %v999 = vsel %vm954, %v996, %v998
      %v1000 = vrot.slane %v879, 1
      %v1001 = vrot.slane %v880, 1
      %v1002 = vsel %vm954, %v1000, %v1001
      %v1003 = vrot.slane %v881, 1
      %v1004 = vsel %vm954, %v1001, %v1003
      %v1005 = vrot.slane %v882, 1
      %v1006 = vrot.slane %v883, 1
      %v1007 = vsel %vm954, %v1005, %v1006
      %v1008 = vrot.slane %v884, 1
      %v1009 = vsel %vm954, %v1006, %v1008
      %v1010 = vrot.slane %v885, 1
      %v1011 = vrot.slane %v886, 1
      %v1012 = vsel %vm954, %v1010, %v1011
      %v1013 = vrot.slane %v887, 1
      %v1014 = vsel %vm954, %v1011, %v1013
      %v1015 = vrot.slane %v888, 1
      %v1016 = vrot.slane %v889, 1
      %v1017 = vsel %vm954, %v1015, %v1016
      %v1018 = vrot.slane %v890, 1
      %v1019 = vsel %vm954, %v1016, %v1018
      %v1020 = vrot.slane %v891, 1
      %v1021 = vrot.slane %v892, 1
      %v1022 = vsel %vm954, %v1020, %v1021
      %v1023 = vrot.slane %v893, 1
      %v1024 = vsel %vm954, %v1021, %v1023
      %v1025 = vrot.slane %v894, 1
      %v1026 = vrot.slane %v895, 1
      %v1027 = vsel %vm954, %v1025, %v1026
      %v1028 = vrot.slane %v896, 1
      %v1029 = vsel %vm954, %v1026, %v1028
      %v1030 = vrot.slane %v897, 1
      %v1031 = vrot.slane %v898, 1
      %v1032 = vsel %vm954, %v1030, %v1031
      %v1033 = vrot.slane %v899, 1
      %v1034 = vsel %vm954, %v1031, %v1033
      %1035 = vrot.lane.b32.xlu0 %v957, 32
      %v1036 = vpop.permute.xlu0 %1035
      %1037 = vrot.lane.b32.xlu0 %v959, 32
      %v1038 = vpop.permute.xlu0 %1037
      %1039 = vrot.lane.b32.xlu0 %v962, 32
      %v1040 = vpop.permute.xlu0 %1039
      %1041 = vrot.lane.b32.xlu0 %v964, 32
      %v1042 = vpop.permute.xlu0 %1041
      %1043 = vrot.lane.b32.xlu0 %v967, 32
      %v1044 = vpop.permute.xlu0 %1043
      %1045 = vrot.lane.b32.xlu0 %v969, 32
      %v1046 = vpop.permute.xlu0 %1045
      %1047 = vrot.lane.b32.xlu0 %v972, 32
      %v1048 = vpop.permute.xlu0 %1047
      %1049 = vrot.lane.b32.xlu0 %v974, 32
      %v1050 = vpop.permute.xlu0 %1049
      %1051 = vrot.lane.b32.xlu0 %v977, 32
      %v1052 = vpop.permute.xlu0 %1051
      %1053 = vrot.lane.b32.xlu0 %v979, 32
      %v1054 = vpop.permute.xlu0 %1053
      %1055 = vrot.lane.b32.xlu0 %v982, 32
      %v1056 = vpop.permute.xlu0 %1055
      %1057 = vrot.lane.b32.xlu0 %v984, 32
      %v1058 = vpop.permute.xlu0 %1057
      %1059 = vrot.lane.b32.xlu0 %v987, 32
      %v1060 = vpop.permute.xlu0 %1059
      %1061 = vrot.lane.b32.xlu0 %v989, 32
      %v1062 = vpop.permute.xlu0 %1061
      %1063 = vrot.lane.b32.xlu0 %v992, 32
      %v1064 = vpop.permute.xlu0 %1063
      %1065 = vrot.lane.b32.xlu0 %v994, 32
      %v1066 = vpop.permute.xlu0 %1065
      %1067 = vrot.lane.b32.xlu0 %v997, 32
      %v1068 = vpop.permute.xlu0 %1067
      %1069 = vrot.lane.b32.xlu0 %v999, 32
      %v1070 = vpop.permute.xlu0 %1069
      %1071 = vrot.lane.b32.xlu0 %v1002, 32
      %v1072 = vpop.permute.xlu0 %1071
      %1073 = vrot.lane.b32.xlu0 %v1004, 32
      %v1074 = vpop.permute.xlu0 %1073
      %1075 = vrot.lane.b32.xlu0 %v1007, 32
      %v1076 = vpop.permute.xlu0 %1075
      %1077 = vrot.lane.b32.xlu0 %v1009, 32
      %v1078 = vpop.permute.xlu0 %1077
      %1079 = vrot.lane.b32.xlu0 %v1012, 32
      %v1080 = vpop.permute.xlu0 %1079
      %1081 = vrot.lane.b32.xlu0 %v1014, 32
      %v1082 = vpop.permute.xlu0 %1081
      %1083 = vrot.lane.b32.xlu0 %v1017, 32
      %v1084 = vpop.permute.xlu0 %1083
      %1085 = vrot.lane.b32.xlu0 %v1019, 32
      %v1086 = vpop.permute.xlu0 %1085
      %1087 = vrot.lane.b32.xlu0 %v1022, 32
      %v1088 = vpop.permute.xlu0 %1087
      %1089 = vrot.lane.b32.xlu0 %v1024, 32
      %v1090 = vpop.permute.xlu0 %1089
      %1091 = vrot.lane.b32.xlu0 %v1027, 32
      %v1092 = vpop.permute.xlu0 %1091
      %1093 = vrot.lane.b32.xlu0 %v1029, 32
      %v1094 = vpop.permute.xlu0 %1093
      %1095 = vrot.lane.b32.xlu0 %v1032, 32
      %v1096 = vpop.permute.xlu0 %1095
      %1097 = vrot.lane.b32.xlu0 %v1034, 32
      %v1098 = vpop.permute.xlu0 %1097
      %vm1131 = vcmask 1045504
      %v1132 = vrot.slane %v852, 2
      %v1133 = vrot.slane %v853, 2
      %v1134 = vsel %vm1131, %v1132, %v1133
      %v1135 = vrot.slane %v854, 2
      %v1136 = vsel %vm1131, %v1133, %v1135
      %v1137 = vrot.slane %v855, 2
      %v1138 = vrot.slane %v856, 2
      %v1139 = vsel %vm1131, %v1137, %v1138
      %v1140 = vrot.slane %v857, 2
      %v1141 = vsel %vm1131, %v1138, %v1140
      %v1142 = vrot.slane %v858, 2
      %v1143 = vrot.slane %v859, 2
      %v1144 = vsel %vm1131, %v1142, %v1143
      %v1145 = vrot.slane %v860, 2
      %v1146 = vsel %vm1131, %v1143, %v1145
      %v1147 = vrot.slane %v861, 2
      %v1148 = vrot.slane %v862, 2
      %v1149 = vsel %vm1131, %v1147, %v1148
      %v1150 = vrot.slane %v863, 2
      %v1151 = vsel %vm1131, %v1148, %v1150
      %v1152 = vrot.slane %v864, 2
      %v1153 = vrot.slane %v865, 2
      %v1154 = vsel %vm1131, %v1152, %v1153
      %v1155 = vrot.slane %v866, 2
      %v1156 = vsel %vm1131, %v1153, %v1155
      %v1157 = vrot.slane %v867, 2
      %v1158 = vrot.slane %v868, 2
      %v1159 = vsel %vm1131, %v1157, %v1158
      %v1160 = vrot.slane %v869, 2
      %v1161 = vsel %vm1131, %v1158, %v1160
      %v1162 = vrot.slane %v870, 2
      %v1163 = vrot.slane %v871, 2
      %v1164 = vsel %vm1131, %v1162, %v1163
      %v1165 = vrot.slane %v872, 2
      %v1166 = vsel %vm1131, %v1163, %v1165
      %v1167 = vrot.slane %v873, 2
      %v1168 = vrot.slane %v874, 2
      %v1169 = vsel %vm1131, %v1167, %v1168
      %v1170 = vrot.slane %v875, 2
      %v1171 = vsel %vm1131, %v1168, %v1170
      %v1172 = vrot.slane %v876, 2
      %v1173 = vrot.slane %v877, 2
      %v1174 = vsel %vm1131, %v1172, %v1173
      %v1175 = vrot.slane %v878, 2
      %v1176 = vsel %vm1131, %v1173, %v1175
      %v1177 = vrot.slane %v879, 2
      %v1178 = vrot.slane %v880, 2
      %v1179 = vsel %vm1131, %v1177, %v1178
      %v1180 = vrot.slane %v881, 2
      %v1181 = vsel %vm1131, %v1178, %v1180
      %v1182 = vrot.slane %v882, 2
      %v1183 = vrot.slane %v883, 2
      %v1184 = vsel %vm1131, %v1182, %v1183
      %v1185 = vrot.slane %v884, 2
      %v1186 = vsel %vm1131, %v1183, %v1185
      %v1187 = vrot.slane %v885, 2
      %v1188 = vrot.slane %v886, 2
      %v1189 = vsel %vm1131, %v1187, %v1188
      %v1190 = vrot.slane %v887, 2
      %v1191 = vsel %vm1131, %v1188, %v1190
      %v1192 = vrot.slane %v888, 2
      %v1193 = vrot.slane %v889, 2
      %v1194 = vsel %vm1131, %v1192, %v1193
      %v1195 = vrot.slane %v890, 2
      %v1196 = vsel %vm1131, %v1193, %v1195
      %v1197 = vrot.slane %v891, 2
      %v1198 = vrot.slane %v892, 2
      %v1199 = vsel %vm1131, %v1197, %v1198
      %v1200 = vrot.slane %v893, 2
      %v1201 = vsel %vm1131, %v1198, %v1200
      %v1202 = vrot.slane %v894, 2
      %v1203 = vrot.slane %v895, 2
      %v1204 = vsel %vm1131, %v1202, %v1203
      %v1205 = vrot.slane %v896, 2
      %v1206 = vsel %vm1131, %v1203, %v1205
      %v1207 = vrot.slane %v897, 2
      %v1208 = vrot.slane %v898, 2
      %v1209 = vsel %vm1131, %v1207, %v1208
      %v1210 = vrot.slane %v899, 2
      %v1211 = vsel %vm1131, %v1208, %v1210
      %1212 = vrot.lane.b32.xlu0 %v1134, 64
      %v1213 = vpop.permute.xlu0 %1212
      %1214 = vrot.lane.b32.xlu0 %v1136, 64
      %v1215 = vpop.permute.xlu0 %1214
      %1216 = vrot.lane.b32.xlu0 %v1139, 64
      %v1217 = vpop.permute.xlu0 %1216
      %1218 = vrot.lane.b32.xlu0 %v1141, 64
      %v1219 = vpop.permute.xlu0 %1218
      %1220 = vrot.lane.b32.xlu0 %v1144, 64
      %v1221 = vpop.permute.xlu0 %1220
      %1222 = vrot.lane.b32.xlu0 %v1146, 64
      %v1223 = vpop.permute.xlu0 %1222
      %1224 = vrot.lane.b32.xlu0 %v1149, 64
      %v1225 = vpop.permute.xlu0 %1224
      %1226 = vrot.lane.b32.xlu0 %v1151, 64
      %v1227 = vpop.permute.xlu0 %1226
      %1228 = vrot.lane.b32.xlu0 %v1154, 64
      %v1229 = vpop.permute.xlu0 %1228
      %1230 = vrot.lane.b32.xlu0 %v1156, 64
      %v1231 = vpop.permute.xlu0 %1230
      %1232 = vrot.lane.b32.xlu0 %v1159, 64
      %v1233 = vpop.permute.xlu0 %1232
      %1234 = vrot.lane.b32.xlu0 %v1161, 64
      %v1235 = vpop.permute.xlu0 %1234
      %1236 = vrot.lane.b32.xlu0 %v1164, 64
      %v1237 = vpop.permute.xlu0 %1236
      %1238 = vrot.lane.b32.xlu0 %v1166, 64
      %v1239 = vpop.permute.xlu0 %1238
      %1240 = vrot.lane.b32.xlu0 %v1169, 64
      %v1241 = vpop.permute.xlu0 %1240
      %1242 = vrot.lane.b32.xlu0 %v1171, 64
      %v1243 = vpop.permute.xlu0 %1242
      %1244 = vrot.lane.b32.xlu0 %v1174, 64
      %v1245 = vpop.permute.xlu0 %1244
      %1246 = vrot.lane.b32.xlu0 %v1176, 64
      %v1247 = vpop.permute.xlu0 %1246
      %1248 = vrot.lane.b32.xlu0 %v1179, 64
      %v1249 = vpop.permute.xlu0 %1248
      %1250 = vrot.lane.b32.xlu0 %v1181, 64
      %v1251 = vpop.permute.xlu0 %1250
      %1252 = vrot.lane.b32.xlu0 %v1184, 64
      %v1253 = vpop.permute.xlu0 %1252
      %1254 = vrot.lane.b32.xlu0 %v1186, 64
      %v1255 = vpop.permute.xlu0 %1254
      %1256 = vrot.lane.b32.xlu0 %v1189, 64
      %v1257 = vpop.permute.xlu0 %1256
      %1258 = vrot.lane.b32.xlu0 %v1191, 64
      %v1259 = vpop.permute.xlu0 %1258
      %1260 = vrot.lane.b32.xlu0 %v1194, 64
      %v1261 = vpop.permute.xlu0 %1260
      %1262 = vrot.lane.b32.xlu0 %v1196, 64
      %v1263 = vpop.permute.xlu0 %1262
      %1264 = vrot.lane.b32.xlu0 %v1199, 64
      %v1265 = vpop.permute.xlu0 %1264
      %1266 = vrot.lane.b32.xlu0 %v1201, 64
      %v1267 = vpop.permute.xlu0 %1266
      %1268 = vrot.lane.b32.xlu0 %v1204, 64
      %v1269 = vpop.permute.xlu0 %1268
      %1270 = vrot.lane.b32.xlu0 %v1206, 64
      %v1271 = vpop.permute.xlu0 %1270
      %1272 = vrot.lane.b32.xlu0 %v1209, 64
      %v1273 = vpop.permute.xlu0 %1272
      %1274 = vrot.lane.b32.xlu0 %v1211, 64
      %v1275 = vpop.permute.xlu0 %1274
      %1310 = vrot.lane.b32.xlu0 %v855, 96
      %v1311 = vpop.permute.xlu0 %1310
      %1312 = vrot.lane.b32.xlu0 %v856, 96
      %v1313 = vpop.permute.xlu0 %1312
      %1314 = vrot.lane.b32.xlu0 %v858, 96
      %v1315 = vpop.permute.xlu0 %1314
      %1316 = vrot.lane.b32.xlu0 %v859, 96
      %v1317 = vpop.permute.xlu0 %1316
      %1318 = vrot.lane.b32.xlu0 %v861, 96
      %v1319 = vpop.permute.xlu0 %1318
      %1320 = vrot.lane.b32.xlu0 %v862, 96
      %v1321 = vpop.permute.xlu0 %1320
      %1322 = vrot.lane.b32.xlu0 %v864, 96
      %v1323 = vpop.permute.xlu0 %1322
      %1324 = vrot.lane.b32.xlu0 %v865, 96
      %v1325 = vpop.permute.xlu0 %1324
      %1326 = vrot.lane.b32.xlu0 %v867, 96
      %v1327 = vpop.permute.xlu0 %1326
      %1328 = vrot.lane.b32.xlu0 %v868, 96
      %v1329 = vpop.permute.xlu0 %1328
      %1330 = vrot.lane.b32.xlu0 %v870, 96
      %v1331 = vpop.permute.xlu0 %1330
      %1332 = vrot.lane.b32.xlu0 %v871, 96
      %v1333 = vpop.permute.xlu0 %1332
      %1334 = vrot.lane.b32.xlu0 %v873, 96
      %v1335 = vpop.permute.xlu0 %1334
      %1336 = vrot.lane.b32.xlu0 %v874, 96
      %v1337 = vpop.permute.xlu0 %1336
      %1338 = vrot.lane.b32.xlu0 %v876, 96
      %v1339 = vpop.permute.xlu0 %1338
      %1340 = vrot.lane.b32.xlu0 %v877, 96
      %v1341 = vpop.permute.xlu0 %1340
      %1342 = vrot.lane.b32.xlu0 %v879, 96
      %v1343 = vpop.permute.xlu0 %1342
      %1344 = vrot.lane.b32.xlu0 %v880, 96
      %v1345 = vpop.permute.xlu0 %1344
      %1346 = vrot.lane.b32.xlu0 %v882, 96
      %v1347 = vpop.permute.xlu0 %1346
      %1348 = vrot.lane.b32.xlu0 %v883, 96
      %v1349 = vpop.permute.xlu0 %1348
      %1350 = vrot.lane.b32.xlu0 %v885, 96
      %v1351 = vpop.permute.xlu0 %1350
      %1352 = vrot.lane.b32.xlu0 %v886, 96
      %v1353 = vpop.permute.xlu0 %1352
      %1354 = vrot.lane.b32.xlu0 %v888, 96
      %v1355 = vpop.permute.xlu0 %1354
      %1356 = vrot.lane.b32.xlu0 %v889, 96
      %v1357 = vpop.permute.xlu0 %1356
      %1358 = vrot.lane.b32.xlu0 %v891, 96
      %v1359 = vpop.permute.xlu0 %1358
      %1360 = vrot.lane.b32.xlu0 %v892, 96
      %v1361 = vpop.permute.xlu0 %1360
      %1362 = vrot.lane.b32.xlu0 %v894, 96
      %v1363 = vpop.permute.xlu0 %1362
      %1364 = vrot.lane.b32.xlu0 %v895, 96
      %v1365 = vpop.permute.xlu0 %1364
      %1366 = vrot.lane.b32.xlu0 %v897, 96
      %v1367 = vpop.permute.xlu0 %1366
      %1368 = vrot.lane.b32.xlu0 %v898, 96
      %v1369 = vpop.permute.xlu0 %1368
      %1370 = vrot.lane.b32.xlu0 %v900, 96
      %v1371 = vpop.permute.xlu0 %1370
      %1372 = vrot.lane.b32.xlu0 %v901, 96
      %v1373 = vpop.permute.xlu0 %1372
      %v1407 = vrot.slane %v900, 1
      %v1408 = vrot.slane %v901, 1
      %v1409 = vsel %vm954, %v1407, %v1408
      %v1410 = vrot.slane %v902, 1
      %v1411 = vsel %vm954, %v1408, %v1410
      %v1444 = vrot.slane %v900, 2
      %v1445 = vrot.slane %v901, 2
      %v1446 = vsel %vm1131, %v1444, %v1445
      %v1447 = vrot.slane %v902, 2
      %v1448 = vsel %vm1131, %v1445, %v1447
      %1449 = vrot.lane.b32.xlu0 %v1139, 32
      %v1450 = vpop.permute.xlu0 %1449
      %1451 = vrot.lane.b32.xlu0 %v1141, 32
      %v1452 = vpop.permute.xlu0 %1451
      %1453 = vrot.lane.b32.xlu0 %v1144, 32
      %v1454 = vpop.permute.xlu0 %1453
      %1455 = vrot.lane.b32.xlu0 %v1146, 32
      %v1456 = vpop.permute.xlu0 %1455
      %1457 = vrot.lane.b32.xlu0 %v1149, 32
      %v1458 = vpop.permute.xlu0 %1457
      %1459 = vrot.lane.b32.xlu0 %v1151, 32
      %v1460 = vpop.permute.xlu0 %1459
      %1461 = vrot.lane.b32.xlu0 %v1154, 32
      %v1462 = vpop.permute.xlu0 %1461
      %1463 = vrot.lane.b32.xlu0 %v1156, 32
      %v1464 = vpop.permute.xlu0 %1463
      %1465 = vrot.lane.b32.xlu0 %v1159, 32
      %v1466 = vpop.permute.xlu0 %1465
      %1467 = vrot.lane.b32.xlu0 %v1161, 32
      %v1468 = vpop.permute.xlu0 %1467
      %1469 = vrot.lane.b32.xlu0 %v1164, 32
      %v1470 = vpop.permute.xlu0 %1469
      %1471 = vrot.lane.b32.xlu0 %v1166, 32
      %v1472 = vpop.permute.xlu0 %1471
      %1473 = vrot.lane.b32.xlu0 %v1169, 32
      %v1474 = vpop.permute.xlu0 %1473
      %1475 = vrot.lane.b32.xlu0 %v1171, 32
      %v1476 = vpop.permute.xlu0 %1475
      %1477 = vrot.lane.b32.xlu0 %v1174, 32
      %v1478 = vpop.permute.xlu0 %1477
      %1479 = vrot.lane.b32.xlu0 %v1176, 32
      %v1480 = vpop.permute.xlu0 %1479
      %1481 = vrot.lane.b32.xlu0 %v1179, 32
      %v1482 = vpop.permute.xlu0 %1481
      %1483 = vrot.lane.b32.xlu0 %v1181, 32
      %v1484 = vpop.permute.xlu0 %1483
      %1485 = vrot.lane.b32.xlu0 %v1184, 32
      %v1486 = vpop.permute.xlu0 %1485
      %1487 = vrot.lane.b32.xlu0 %v1186, 32
      %v1488 = vpop.permute.xlu0 %1487
      %1489 = vrot.lane.b32.xlu0 %v1189, 32
      %v1490 = vpop.permute.xlu0 %1489
      %1491 = vrot.lane.b32.xlu0 %v1191, 32
      %v1492 = vpop.permute.xlu0 %1491
      %1493 = vrot.lane.b32.xlu0 %v1194, 32
      %v1494 = vpop.permute.xlu0 %1493
      %1495 = vrot.lane.b32.xlu0 %v1196, 32
      %v1496 = vpop.permute.xlu0 %1495
      %1497 = vrot.lane.b32.xlu0 %v1199, 32
      %v1498 = vpop.permute.xlu0 %1497
      %1499 = vrot.lane.b32.xlu0 %v1201, 32
      %v1500 = vpop.permute.xlu0 %1499
      %1501 = vrot.lane.b32.xlu0 %v1204, 32
      %v1502 = vpop.permute.xlu0 %1501
      %1503 = vrot.lane.b32.xlu0 %v1206, 32
      %v1504 = vpop.permute.xlu0 %1503
      %1505 = vrot.lane.b32.xlu0 %v1209, 32
      %v1506 = vpop.permute.xlu0 %1505
      %1507 = vrot.lane.b32.xlu0 %v1211, 32
      %v1508 = vpop.permute.xlu0 %1507
      %1509 = vrot.lane.b32.xlu0 %v1446, 32
      %v1510 = vpop.permute.xlu0 %1509
      %1511 = vrot.lane.b32.xlu0 %v1448, 32
      %v1512 = vpop.permute.xlu0 %1511
      %1547 = vrot.lane.b32.xlu0 %v858, 64
      %v1548 = vpop.permute.xlu0 %1547
      %1549 = vrot.lane.b32.xlu0 %v859, 64
      %v1550 = vpop.permute.xlu0 %1549
      %1551 = vrot.lane.b32.xlu0 %v861, 64
      %v1552 = vpop.permute.xlu0 %1551
      %1553 = vrot.lane.b32.xlu0 %v862, 64
      %v1554 = vpop.permute.xlu0 %1553
      %1555 = vrot.lane.b32.xlu0 %v864, 64
      %v1556 = vpop.permute.xlu0 %1555
      %1557 = vrot.lane.b32.xlu0 %v865, 64
      %v1558 = vpop.permute.xlu0 %1557
      %1559 = vrot.lane.b32.xlu0 %v867, 64
      %v1560 = vpop.permute.xlu0 %1559
      %1561 = vrot.lane.b32.xlu0 %v868, 64
      %v1562 = vpop.permute.xlu0 %1561
      %1563 = vrot.lane.b32.xlu0 %v870, 64
      %v1564 = vpop.permute.xlu0 %1563
      %1565 = vrot.lane.b32.xlu0 %v871, 64
      %v1566 = vpop.permute.xlu0 %1565
      %1567 = vrot.lane.b32.xlu0 %v873, 64
      %v1568 = vpop.permute.xlu0 %1567
      %1569 = vrot.lane.b32.xlu0 %v874, 64
      %v1570 = vpop.permute.xlu0 %1569
      %1571 = vrot.lane.b32.xlu0 %v876, 64
      %v1572 = vpop.permute.xlu0 %1571
      %1573 = vrot.lane.b32.xlu0 %v877, 64
      %v1574 = vpop.permute.xlu0 %1573
      %1575 = vrot.lane.b32.xlu0 %v879, 64
      %v1576 = vpop.permute.xlu0 %1575
      %1577 = vrot.lane.b32.xlu0 %v880, 64
      %v1578 = vpop.permute.xlu0 %1577
      %1579 = vrot.lane.b32.xlu0 %v882, 64
      %v1580 = vpop.permute.xlu0 %1579
      %1581 = vrot.lane.b32.xlu0 %v883, 64
      %v1582 = vpop.permute.xlu0 %1581
      %1583 = vrot.lane.b32.xlu0 %v885, 64
      %v1584 = vpop.permute.xlu0 %1583
      %1585 = vrot.lane.b32.xlu0 %v886, 64
      %v1586 = vpop.permute.xlu0 %1585
      %1587 = vrot.lane.b32.xlu0 %v888, 64
      %v1588 = vpop.permute.xlu0 %1587
      %1589 = vrot.lane.b32.xlu0 %v889, 64
      %v1590 = vpop.permute.xlu0 %1589
      %1591 = vrot.lane.b32.xlu0 %v891, 64
      %v1592 = vpop.permute.xlu0 %1591
      %1593 = vrot.lane.b32.xlu0 %v892, 64
      %v1594 = vpop.permute.xlu0 %1593
      %1595 = vrot.lane.b32.xlu0 %v894, 64
      %v1596 = vpop.permute.xlu0 %1595
      %1597 = vrot.lane.b32.xlu0 %v895, 64
      %v1598 = vpop.permute.xlu0 %1597
      %1599 = vrot.lane.b32.xlu0 %v897, 64
      %v1600 = vpop.permute.xlu0 %1599
      %1601 = vrot.lane.b32.xlu0 %v898, 64
      %v1602 = vpop.permute.xlu0 %1601
      %1603 = vrot.lane.b32.xlu0 %v900, 64
      %v1604 = vpop.permute.xlu0 %1603
      %1605 = vrot.lane.b32.xlu0 %v901, 64
      %v1606 = vpop.permute.xlu0 %1605
      %1607 = vrot.lane.b32.xlu0 %v903, 64
      %v1608 = vpop.permute.xlu0 %1607
      %1609 = vrot.lane.b32.xlu0 %v904, 64
      %v1610 = vpop.permute.xlu0 %1609
      %v1644 = vrot.slane %v903, 1
      %v1645 = vrot.slane %v904, 1
      %v1646 = vsel %vm954, %v1644, %v1645
      %v1647 = vrot.slane %v905, 1
      %v1648 = vsel %vm954, %v1645, %v1647
      %1649 = vrot.lane.b32.xlu0 %v967, 96
      %v1650 = vpop.permute.xlu0 %1649
      %1651 = vrot.lane.b32.xlu0 %v969, 96
      %v1652 = vpop.permute.xlu0 %1651
      %1653 = vrot.lane.b32.xlu0 %v972, 96
      %v1654 = vpop.permute.xlu0 %1653
      %1655 = vrot.lane.b32.xlu0 %v974, 96
      %v1656 = vpop.permute.xlu0 %1655
      %1657 = vrot.lane.b32.xlu0 %v977, 96
      %v1658 = vpop.permute.xlu0 %1657
      %1659 = vrot.lane.b32.xlu0 %v979, 96
      %v1660 = vpop.permute.xlu0 %1659
      %1661 = vrot.lane.b32.xlu0 %v982, 96
      %v1662 = vpop.permute.xlu0 %1661
      %1663 = vrot.lane.b32.xlu0 %v984, 96
      %v1664 = vpop.permute.xlu0 %1663
      %1665 = vrot.lane.b32.xlu0 %v987, 96
      %v1666 = vpop.permute.xlu0 %1665
      %1667 = vrot.lane.b32.xlu0 %v989, 96
      %v1668 = vpop.permute.xlu0 %1667
      %1669 = vrot.lane.b32.xlu0 %v992, 96
      %v1670 = vpop.permute.xlu0 %1669
      %1671 = vrot.lane.b32.xlu0 %v994, 96
      %v1672 = vpop.permute.xlu0 %1671
      %1673 = vrot.lane.b32.xlu0 %v997, 96
      %v1674 = vpop.permute.xlu0 %1673
      %1675 = vrot.lane.b32.xlu0 %v999, 96
      %v1676 = vpop.permute.xlu0 %1675
      %1677 = vrot.lane.b32.xlu0 %v1002, 96
      %v1678 = vpop.permute.xlu0 %1677
      %1679 = vrot.lane.b32.xlu0 %v1004, 96
      %v1680 = vpop.permute.xlu0 %1679
      %1681 = vrot.lane.b32.xlu0 %v1007, 96
      %v1682 = vpop.permute.xlu0 %1681
      %1683 = vrot.lane.b32.xlu0 %v1009, 96
      %v1684 = vpop.permute.xlu0 %1683
      %1685 = vrot.lane.b32.xlu0 %v1012, 96
      %v1686 = vpop.permute.xlu0 %1685
      %1687 = vrot.lane.b32.xlu0 %v1014, 96
      %v1688 = vpop.permute.xlu0 %1687
      %1689 = vrot.lane.b32.xlu0 %v1017, 96
      %v1690 = vpop.permute.xlu0 %1689
      %1691 = vrot.lane.b32.xlu0 %v1019, 96
      %v1692 = vpop.permute.xlu0 %1691
      %1693 = vrot.lane.b32.xlu0 %v1022, 96
      %v1694 = vpop.permute.xlu0 %1693
      %1695 = vrot.lane.b32.xlu0 %v1024, 96
      %v1696 = vpop.permute.xlu0 %1695
      %1697 = vrot.lane.b32.xlu0 %v1027, 96
      %v1698 = vpop.permute.xlu0 %1697
      %1699 = vrot.lane.b32.xlu0 %v1029, 96
      %v1700 = vpop.permute.xlu0 %1699
      %1701 = vrot.lane.b32.xlu0 %v1032, 96
      %v1702 = vpop.permute.xlu0 %1701
      %1703 = vrot.lane.b32.xlu0 %v1034, 96
      %v1704 = vpop.permute.xlu0 %1703
      %1705 = vrot.lane.b32.xlu0 %v1409, 96
      %v1706 = vpop.permute.xlu0 %1705
      %1707 = vrot.lane.b32.xlu0 %v1411, 96
      %v1708 = vpop.permute.xlu0 %1707
      %1709 = vrot.lane.b32.xlu0 %v1646, 96
      %v1710 = vpop.permute.xlu0 %1709
      %1711 = vrot.lane.b32.xlu0 %v1648, 96
      %v1712 = vpop.permute.xlu0 %1711
      %v1745 = vrot.slane %v903, 2
      %v1746 = vrot.slane %v904, 2
      %v1747 = vsel %vm1131, %v1745, %v1746
      %v1748 = vrot.slane %v905, 2
      %v1749 = vsel %vm1131, %v1746, %v1748
      %v1782 = vsel %vm280, %v852, %v1036
      %v1783 = vsel %vm280, %v853, %v1038
      %v1784 = vsel %vm280, %v855, %v1040
      %v1785 = vsel %vm280, %v856, %v1042
      %v1786 = vsel %vm280, %v858, %v1044
      %v1787 = vsel %vm280, %v859, %v1046
      %v1788 = vsel %vm280, %v861, %v1048
      %v1789 = vsel %vm280, %v862, %v1050
      %v1790 = vsel %vm280, %v864, %v1052
      %v1791 = vsel %vm280, %v865, %v1054
      %v1792 = vsel %vm280, %v867, %v1056
      %v1793 = vsel %vm280, %v868, %v1058
      %v1794 = vsel %vm280, %v870, %v1060
      %v1795 = vsel %vm280, %v871, %v1062
      %v1796 = vsel %vm280, %v873, %v1064
      %v1797 = vsel %vm280, %v874, %v1066
      %v1798 = vsel %vm280, %v876, %v1068
      %v1799 = vsel %vm280, %v877, %v1070
      %v1800 = vsel %vm280, %v879, %v1072
      %v1801 = vsel %vm280, %v880, %v1074
      %v1802 = vsel %vm280, %v882, %v1076
      %v1803 = vsel %vm280, %v883, %v1078
      %v1804 = vsel %vm280, %v885, %v1080
      %v1805 = vsel %vm280, %v886, %v1082
      %v1806 = vsel %vm280, %v888, %v1084
      %v1807 = vsel %vm280, %v889, %v1086
      %v1808 = vsel %vm280, %v891, %v1088
      %v1809 = vsel %vm280, %v892, %v1090
      %v1810 = vsel %vm280, %v894, %v1092
      %v1811 = vsel %vm280, %v895, %v1094
      %v1812 = vsel %vm280, %v897, %v1096
      %v1813 = vsel %vm280, %v898, %v1098
      %vm1814 = vcmask 523264
      %v1815 = vsel %vm1814, %v1782, %v1213
      %v1816 = vsel %vm1814, %v1783, %v1215
      %v1817 = vsel %vm1814, %v1784, %v1217
      %v1818 = vsel %vm1814, %v1785, %v1219
      %v1819 = vsel %vm1814, %v1786, %v1221
      %v1820 = vsel %vm1814, %v1787, %v1223
      %v1821 = vsel %vm1814, %v1788, %v1225
      %v1822 = vsel %vm1814, %v1789, %v1227
      %v1823 = vsel %vm1814, %v1790, %v1229
      %v1824 = vsel %vm1814, %v1791, %v1231
      %v1825 = vsel %vm1814, %v1792, %v1233
      %v1826 = vsel %vm1814, %v1793, %v1235
      %v1827 = vsel %vm1814, %v1794, %v1237
      %v1828 = vsel %vm1814, %v1795, %v1239
      %v1829 = vsel %vm1814, %v1796, %v1241
      %v1830 = vsel %vm1814, %v1797, %v1243
      %v1831 = vsel %vm1814, %v1798, %v1245
      %v1832 = vsel %vm1814, %v1799, %v1247
      %v1833 = vsel %vm1814, %v1800, %v1249
      %v1834 = vsel %vm1814, %v1801, %v1251
      %v1835 = vsel %vm1814, %v1802, %v1253
      %v1836 = vsel %vm1814, %v1803, %v1255
      %v1837 = vsel %vm1814, %v1804, %v1257
      %v1838 = vsel %vm1814, %v1805, %v1259
      %v1839 = vsel %vm1814, %v1806, %v1261
      %v1840 = vsel %vm1814, %v1807, %v1263
      %v1841 = vsel %vm1814, %v1808, %v1265
      %v1842 = vsel %vm1814, %v1809, %v1267
      %v1843 = vsel %vm1814, %v1810, %v1269
      %v1844 = vsel %vm1814, %v1811, %v1271
      %v1845 = vsel %vm1814, %v1812, %v1273
      %v1846 = vsel %vm1814, %v1813, %v1275
      %vm1847 = vcmask 785408
      %v1848 = vsel %vm1847, %v1815, %v1311
      %v1849 = vsel %vm1847, %v1816, %v1313
      %v1850 = vsel %vm1847, %v1817, %v1315
      %v1851 = vsel %vm1847, %v1818, %v1317
      %v1852 = vsel %vm1847, %v1819, %v1319
      %v1853 = vsel %vm1847, %v1820, %v1321
      %v1854 = vsel %vm1847, %v1821, %v1323
      %v1855 = vsel %vm1847, %v1822, %v1325
      %v1856 = vsel %vm1847, %v1823, %v1327
      %v1857 = vsel %vm1847, %v1824, %v1329
      %v1858 = vsel %vm1847, %v1825, %v1331
      %v1859 = vsel %vm1847, %v1826, %v1333
      %v1860 = vsel %vm1847, %v1827, %v1335
      %v1861 = vsel %vm1847, %v1828, %v1337
      %v1862 = vsel %vm1847, %v1829, %v1339
      %v1863 = vsel %vm1847, %v1830, %v1341
      %v1864 = vsel %vm1847, %v1831, %v1343
      %v1865 = vsel %vm1847, %v1832, %v1345
      %v1866 = vsel %vm1847, %v1833, %v1347
      %v1867 = vsel %vm1847, %v1834, %v1349
      %v1868 = vsel %vm1847, %v1835, %v1351
      %v1869 = vsel %vm1847, %v1836, %v1353
      %v1870 = vsel %vm1847, %v1837, %v1355
      %v1871 = vsel %vm1847, %v1838, %v1357
      %v1872 = vsel %vm1847, %v1839, %v1359
      %v1873 = vsel %vm1847, %v1840, %v1361
      %v1874 = vsel %vm1847, %v1841, %v1363
      %v1875 = vsel %vm1847, %v1842, %v1365
      %v1876 = vsel %vm1847, %v1843, %v1367
      %v1877 = vsel %vm1847, %v1844, %v1369
      %v1878 = vsel %vm1847, %v1845, %v1371
      %v1879 = vsel %vm1847, %v1846, %v1373
      %v1880 = vsel %vm280, %v962, %v1450
      %v1881 = vsel %vm280, %v964, %v1452
      %v1882 = vsel %vm280, %v967, %v1454
      %v1883 = vsel %vm280, %v969, %v1456
      %v1884 = vsel %vm280, %v972, %v1458
      %v1885 = vsel %vm280, %v974, %v1460
      %v1886 = vsel %vm280, %v977, %v1462
      %v1887 = vsel %vm280, %v979, %v1464
      %v1888 = vsel %vm280, %v982, %v1466
      %v1889 = vsel %vm280, %v984, %v1468
      %v1890 = vsel %vm280, %v987, %v1470
      %v1891 = vsel %vm280, %v989, %v1472
      %v1892 = vsel %vm280, %v992, %v1474
      %v1893 = vsel %vm280, %v994, %v1476
      %v1894 = vsel %vm280, %v997, %v1478
      %v1895 = vsel %vm280, %v999, %v1480
      %v1896 = vsel %vm280, %v1002, %v1482
      %v1897 = vsel %vm280, %v1004, %v1484
      %v1898 = vsel %vm280, %v1007, %v1486
      %v1899 = vsel %vm280, %v1009, %v1488
      %v1900 = vsel %vm280, %v1012, %v1490
      %v1901 = vsel %vm280, %v1014, %v1492
      %v1902 = vsel %vm280, %v1017, %v1494
      %v1903 = vsel %vm280, %v1019, %v1496
      %v1904 = vsel %vm280, %v1022, %v1498
      %v1905 = vsel %vm280, %v1024, %v1500
      %v1906 = vsel %vm280, %v1027, %v1502
      %v1907 = vsel %vm280, %v1029, %v1504
      %v1908 = vsel %vm280, %v1032, %v1506
      %v1909 = vsel %vm280, %v1034, %v1508
      %v1910 = vsel %vm280, %v1409, %v1510
      %v1911 = vsel %vm280, %v1411, %v1512
      %v1912 = vsel %vm1814, %v1880, %v1548
      %v1913 = vsel %vm1814, %v1881, %v1550
      %v1914 = vsel %vm1814, %v1882, %v1552
      %v1915 = vsel %vm1814, %v1883, %v1554
      %v1916 = vsel %vm1814, %v1884, %v1556
      %v1917 = vsel %vm1814, %v1885, %v1558
      %v1918 = vsel %vm1814, %v1886, %v1560
      %v1919 = vsel %vm1814, %v1887, %v1562
      %v1920 = vsel %vm1814, %v1888, %v1564
      %v1921 = vsel %vm1814, %v1889, %v1566
      %v1922 = vsel %vm1814, %v1890, %v1568
      %v1923 = vsel %vm1814, %v1891, %v1570
      %v1924 = vsel %vm1814, %v1892, %v1572
      %v1925 = vsel %vm1814, %v1893, %v1574
      %v1926 = vsel %vm1814, %v1894, %v1576
      %v1927 = vsel %vm1814, %v1895, %v1578
      %v1928 = vsel %vm1814, %v1896, %v1580
      %v1929 = vsel %vm1814, %v1897, %v1582
      %v1930 = vsel %vm1814, %v1898, %v1584
      %v1931 = vsel %vm1814, %v1899, %v1586
      %v1932 = vsel %vm1814, %v1900, %v1588
      %v1933 = vsel %vm1814, %v1901, %v1590
      %v1934 = vsel %vm1814, %v1902, %v1592
      %v1935 = vsel %vm1814, %v1903, %v1594
      %v1936 = vsel %vm1814, %v1904, %v1596
      %v1937 = vsel %vm1814, %v1905, %v1598
      %v1938 = vsel %vm1814, %v1906, %v1600
      %v1939 = vsel %vm1814, %v1907, %v1602
      %v1940 = vsel %vm1814, %v1908, %v1604
      %v1941 = vsel %vm1814, %v1909, %v1606
      %v1942 = vsel %vm1814, %v1910, %v1608
      %v1943 = vsel %vm1814, %v1911, %v1610
      %v1944 = vsel %vm1847, %v1912, %v1650
      %v1945 = vsel %vm1847, %v1913, %v1652
      %v1946 = vsel %vm1847, %v1914, %v1654
      %v1947 = vsel %vm1847, %v1915, %v1656
      %v1948 = vsel %vm1847, %v1916, %v1658
      %v1949 = vsel %vm1847, %v1917, %v1660
      %v1950 = vsel %vm1847, %v1918, %v1662
      %v1951 = vsel %vm1847, %v1919, %v1664
      %v1952 = vsel %vm1847, %v1920, %v1666
      %v1953 = vsel %vm1847, %v1921, %v1668
      %v1954 = vsel %vm1847, %v1922, %v1670
      %v1955 = vsel %vm1847, %v1923, %v1672
      %v1956 = vsel %vm1847, %v1924, %v1674
      %v1957 = vsel %vm1847, %v1925, %v1676
      %v1958 = vsel %vm1847, %v1926, %v1678
      %v1959 = vsel %vm1847, %v1927, %v1680
      %v1960 = vsel %vm1847, %v1928, %v1682
      %v1961 = vsel %vm1847, %v1929, %v1684
      %v1962 = vsel %vm1847, %v1930, %v1686
      %v1963 = vsel %vm1847, %v1931, %v1688
      %v1964 = vsel %vm1847, %v1932, %v1690
      %v1965 = vsel %vm1847, %v1933, %v1692
      %v1966 = vsel %vm1847, %v1934, %v1694
      %v1967 = vsel %vm1847, %v1935, %v1696
      %v1968 = vsel %vm1847, %v1936, %v1698
      %v1969 = vsel %vm1847, %v1937, %v1700
      %v1970 = vsel %vm1847, %v1938, %v1702
      %v1971 = vsel %vm1847, %v1939, %v1704
      %v1972 = vsel %vm1847, %v1940, %v1706
      %v1973 = vsel %vm1847, %v1941, %v1708
      %v1974 = vsel %vm1847, %v1942, %v1710
      %v1975 = vsel %vm1847, %v1943, %v1712
      %v1976 = vpack.c.bf16 %v1849, %v1848
      %v1977 = vpack.c.bf16 %v1945, %v1944
      %v1978 = vpack.c.bf16 %v1146, %v1144
      %v1979 = vpack.c.bf16 %v1851, %v1850
      %v1980 = vpack.c.bf16 %v1947, %v1946
      %v1981 = vpack.c.bf16 %v1151, %v1149
      %v1982 = vpack.c.bf16 %v1853, %v1852
      %v1983 = vpack.c.bf16 %v1949, %v1948
      %v1984 = vpack.c.bf16 %v1156, %v1154
      %v1985 = vpack.c.bf16 %v1855, %v1854
      %v1986 = vpack.c.bf16 %v1951, %v1950
      %v1987 = vpack.c.bf16 %v1161, %v1159
      %v1988 = vpack.c.bf16 %v1857, %v1856
      %v1989 = vpack.c.bf16 %v1953, %v1952
      %v1990 = vpack.c.bf16 %v1166, %v1164
      %v1991 = vpack.c.bf16 %v1859, %v1858
      %v1992 = vpack.c.bf16 %v1955, %v1954
      %v1993 = vpack.c.bf16 %v1171, %v1169
      %v1994 = vpack.c.bf16 %v1861, %v1860
      %v1995 = vpack.c.bf16 %v1957, %v1956
      %v1996 = vpack.c.bf16 %v1176, %v1174
      %v1997 = vpack.c.bf16 %v1863, %v1862
      %v1998 = vpack.c.bf16 %v1959, %v1958
      %v1999 = vpack.c.bf16 %v1181, %v1179
      %v2000 = vpack.c.bf16 %v1865, %v1864
      %v2001 = vpack.c.bf16 %v1961, %v1960
      %v2002 = vpack.c.bf16 %v1186, %v1184
      %v2003 = vpack.c.bf16 %v1867, %v1866
      %v2004 = vpack.c.bf16 %v1963, %v1962
      %v2005 = vpack.c.bf16 %v1191, %v1189
      %v2006 = vpack.c.bf16 %v1869, %v1868
      %v2007 = vpack.c.bf16 %v1965, %v1964
      %v2008 = vpack.c.bf16 %v1196, %v1194
      %v2009 = vpack.c.bf16 %v1871, %v1870
      %v2010 = vpack.c.bf16 %v1967, %v1966
      %v2011 = vpack.c.bf16 %v1201, %v1199
      %v2012 = vpack.c.bf16 %v1873, %v1872
      %v2013 = vpack.c.bf16 %v1969, %v1968
      %v2014 = vpack.c.bf16 %v1206, %v1204
      %v2015 = vpack.c.bf16 %v1875, %v1874
      %v2016 = vpack.c.bf16 %v1971, %v1970
      %v2017 = vpack.c.bf16 %v1211, %v1209
      %v2018 = vpack.c.bf16 %v1877, %v1876
      %v2019 = vpack.c.bf16 %v1973, %v1972
      %v2020 = vpack.c.bf16 %v1448, %v1446
      %v2021 = vpack.c.bf16 %v1879, %v1878
      %v2022 = vpack.c.bf16 %v1975, %v1974
      %v2023 = vpack.c.bf16 %v1749, %v1747
      %v2024 = vld [vmem:[%s6] sm:$0xf]
      %v2025 = vld [vmem:[%s6 + $0x4] sm:$0xf]
      %v2026 = vld [vmem:[%s6 + $0x8] sm:$0xf]
      %v2027 = vld [vmem:[%s6 + $0xc] sm:$0xf]
      %v2028 = vld [vmem:[%s6 + $0x10] sm:$0xf]
      %v2029 = vld [vmem:[%s6 + $0x14] sm:$0xf]
      %v2030 = vld [vmem:[%s6 + $0x18] sm:$0xf]
      %v2031 = vld [vmem:[%s6 + $0x1c] sm:$0xf]
      %v2032 = vld [vmem:[%s6 + $0x20] sm:$0xf]
      %v2033 = vld [vmem:[%s6 + $0x24] sm:$0xf]
      %v2034 = vld [vmem:[%s6 + $0x28] sm:$0xf]
      %v2035 = vld [vmem:[%s6 + $0x2c] sm:$0xf]
      %v2036 = vld [vmem:[%s6 + $0x30] sm:$0xf]
      %v2037 = vld [vmem:[%s6 + $0x34] sm:$0xf]
      %v2038 = vld [vmem:[%s6 + $0x38] sm:$0xf]
      %v2039 = vld [vmem:[%s6 + $0x3c] sm:$0xf]
      %v2040 = vld [vmem:[%s6 + $0x40] sm:$0xf]
      %v2041 = vld [vmem:[%s6 + $0x44] sm:$0xf]
      %v2042 = vld [vmem:[%s6 + $0x48] sm:$0xf]
      %v2043 = vld [vmem:[%s6 + $0x4c] sm:$0xf]
      %v2044 = vld [vmem:[%s6 + $0x50] sm:$0xf]
      %v2045 = vld [vmem:[%s6 + $0x54] sm:$0xf]
      %v2046 = vld [vmem:[%s6 + $0x58] sm:$0xf]
      %v2047 = vld [vmem:[%s6 + $0x5c] sm:$0xf]
      %v2048 = vld [vmem:[%s6 + $0x60] sm:$0xf]
      %v2049 = vld [vmem:[%s6 + $0x64] sm:$0xf]
      %v2050 = vld [vmem:[%s6 + $0x68] sm:$0xf]
      %v2051 = vld [vmem:[%s6 + $0x6c] sm:$0xf]
      %v2052 = vld [vmem:[%s6 + $0x70] sm:$0xf]
      %v2053 = vld [vmem:[%s6 + $0x74] sm:$0xf]
      %v2054 = vld [vmem:[%s6 + $0x78] sm:$0xf]
      %v2055 = vld [vmem:[%s6 + $0x7c] sm:$0xf]
      %v2056 = vld [vmem:[%s6 + $0x80] sm:$0xf]
      %v2057 = vld [vmem:[%s6 + $0x84] sm:$0xf]
      %v2058 = vld [vmem:[%s6 + $0x88] sm:$0xf]
      %v2059 = vld [vmem:[%s6 + $0x8c] sm:$0xf]
      %v2096 = vunpack.c.l.b16 %v2024
      %v2097 = vunpack.c.l.b16 %v2025
      %v2098 = vunpack.c.l.b16 %v2026
      %v2099 = vunpack.c.l.b16 %v2027
      %v2100 = vunpack.c.l.b16 %v2028
      %v2101 = vunpack.c.l.b16 %v2029
      %v2102 = vunpack.c.l.b16 %v2030
      %v2103 = vunpack.c.l.b16 %v2031
      %v2104 = vunpack.c.l.b16 %v2032
      %v2105 = vunpack.c.l.b16 %v2033
      %v2106 = vunpack.c.l.b16 %v2034
      %v2107 = vunpack.c.l.b16 %v2035
      %v2108 = vunpack.c.l.b16 %v2036
      %v2109 = vunpack.c.l.b16 %v2037
      %v2110 = vunpack.c.l.b16 %v2038
      %v2111 = vunpack.c.l.b16 %v2039
      %v2112 = vunpack.c.l.b16 %v2040
      %v2113 = vunpack.c.l.b16 %v2041
      %v2114 = vunpack.c.l.b16 %v2042
      %v2115 = vunpack.c.l.b16 %v2043
      %v2116 = vunpack.c.l.b16 %v2044
      %v2117 = vunpack.c.l.b16 %v2045
      %v2118 = vunpack.c.l.b16 %v2046
      %v2119 = vunpack.c.l.b16 %v2047
      %v2120 = vunpack.c.l.b16 %v2048
      %v2121 = vunpack.c.l.b16 %v2049
      %v2122 = vunpack.c.l.b16 %v2050
      %v2123 = vunpack.c.l.b16 %v2051
      %v2124 = vunpack.c.l.b16 %v2052
      %v2125 = vunpack.c.l.b16 %v2053
      %v2126 = vunpack.c.l.b16 %v2054
      %v2127 = vunpack.c.l.b16 %v2055
      %v2128 = vunpack.c.l.b16 %v2056
      %v2129 = vunpack.c.l.b16 %v2057
      %v2130 = vunpack.c.l.b16 %v2058
      %v2131 = vunpack.c.l.b16 %v2059
      %v2132 = vpack.c.b16 %v2097, %v2096
      %v2133 = vpack.c.b16 %v2099, %v2098
      %v2134 = vpack.c.b16 %v2101, %v2100
      %v2135 = vpack.c.b16 %v2103, %v2102
      %v2136 = vpack.c.b16 %v2105, %v2104
      %v2137 = vpack.c.b16 %v2107, %v2106
      %v2138 = vpack.c.b16 %v2109, %v2108
      %v2139 = vpack.c.b16 %v2111, %v2110
      %v2140 = vpack.c.b16 %v2113, %v2112
      %v2141 = vpack.c.b16 %v2115, %v2114
      %v2142 = vpack.c.b16 %v2117, %v2116
      %v2143 = vpack.c.b16 %v2119, %v2118
      %v2144 = vpack.c.b16 %v2121, %v2120
      %v2145 = vpack.c.b16 %v2123, %v2122
      %v2146 = vpack.c.b16 %v2125, %v2124
      %v2147 = vpack.c.b16 %v2127, %v2126
      %v2148 = vpack.c.b16 %v2129, %v2128
      %v2149 = vpack.c.b16 %v2131, %v2130
      %v2169 = vsel %vm280, %v1978, 0
      %v2172 = vsel %vm280, %v1981, 0
      %v2175 = vsel %vm280, %v1984, 0
      %v2178 = vsel %vm280, %v1987, 0
      %v2181 = vsel %vm280, %v1990, 0
      %v2184 = vsel %vm280, %v1993, 0
      %v2187 = vsel %vm280, %v1996, 0
      %v2190 = vsel %vm280, %v1999, 0
      %v2193 = vsel %vm280, %v2002, 0
      %v2196 = vsel %vm280, %v2005, 0
      %v2199 = vsel %vm280, %v2008, 0
      %v2202 = vsel %vm280, %v2011, 0
      %v2205 = vsel %vm280, %v2014, 0
      %v2208 = vsel %vm280, %v2017, 0
      %v2211 = vsel %vm280, %v2020, 0
      %v2214 = vsel %vm280, %v2023, 0
      %2216 = vmatprep.subr.bf16.mxu0 0
      %2217 = vmatpush1.bf16.msra.mxu0 %v2132
      %2218 = vmatprep.subr.bf16.mxu0 0
      %2219 = vmatpush1.bf16.msra.mxu0 %v2133
      %2220 = vmatprep.subr.bf16.mxu0 0
      %2221 = vmatpush1.bf16.msra.mxu0 %v2134
      %2222 = vmatprep.subr.bf16.mxu0 0
      %2223 = vmatpush1.bf16.msra.mxu0 %v2135
      %2224 = vmatprep.subr.bf16.mxu0 0
      %2225 = vmatpush1.bf16.msra.mxu0 %v2136
      %2226 = vmatprep.subr.bf16.mxu0 0
      %2227 = vmatpush1.bf16.msra.mxu0 %v2137
      %2228 = vmatprep.subr.bf16.mxu0 0
      %2229 = vmatpush1.bf16.msra.mxu0 %v2138
      %2230 = vmatprep.subr.bf16.mxu0 0
      %2231 = vmatpush1.bf16.msra.mxu0 %v2139
      %2232 = vmatprep.subr.bf16.mxu0 0
      %2233 = vmatpush1.bf16.msra.mxu0 %v2140
      %2234 = vmatprep.subr.bf16.mxu0 0
      %2235 = vmatpush1.bf16.msra.mxu0 %v2141
      %2236 = vmatprep.subr.bf16.mxu0 0
      %2237 = vmatpush1.bf16.msra.mxu0 %v2142
      %2238 = vmatprep.subr.bf16.mxu0 0
      %2239 = vmatpush1.bf16.msra.mxu0 %v2143
      %2240 = vmatprep.subr.bf16.mxu0 0
      %2241 = vmatpush1.bf16.msra.mxu0 %v2144
      %2242 = vmatprep.subr.bf16.mxu0 0
      %2243 = vmatpush1.bf16.msra.mxu0 %v2145
      %2244 = vmatprep.subr.bf16.mxu0 0
      %2245 = vmatpush1.bf16.msra.mxu0 %v2146
      %2246 = vmatprep.subr.bf16.mxu0 0
      %2247 = vmatpush1.bf16.msra.mxu0 %v2147
      %2248 = vmatprep.mubr.bf16.mxu0 %v1977
      %2249 = vmatmul.mubr.bf16.gmra.mrb[0].mxu0 %v1976
      %v2250 = vpop.f32.mrb[0].mxu0
      %v2251 = vadd.f32 0.0, %v2250
      %v2252 = vpop.f32.mrb[0].mxu0
      %v2253 = vpop.f32.mrb[0].mxu0
      %v2254 = vadd.f32 0.0, %v2253
      %v2255 = vpop.f32.mrb[0].mxu0
      %2256 = vmatprep.mubr.bf16.mxu0 %v1980
      %2257 = vmatmul.mubr.bf16.gmra.mrb[0].mxu0 %v1979
      %v2258 = vpop.f32.mrb[0].mxu0
      %v2259 = vadd.f32 0.0, %v2258
      %v2260 = vpop.f32.mrb[0].mxu0
      %v2261 = vpop.f32.mrb[0].mxu0
      %v2262 = vadd.f32 0.0, %v2261
      %v2263 = vpop.f32.mrb[0].mxu0
      %2264 = vmatprep.mubr.bf16.mxu0 %v1983
      %2265 = vmatmul.mubr.bf16.gmra.mrb[0].mxu0 %v1982
      %v2266 = vpop.f32.mrb[0].mxu0
      %v2267 = vadd.f32 0.0, %v2266
      %v2268 = vpop.f32.mrb[0].mxu0
      %v2269 = vpop.f32.mrb[0].mxu0
      %v2270 = vadd.f32 0.0, %v2269
      %v2271 = vpop.f32.mrb[0].mxu0
      %2272 = vmatprep.mubr.bf16.mxu0 %v1986
      %2273 = vmatmul.mubr.bf16.gmra.mrb[0].mxu0 %v1985
      %v2274 = vpop.f32.mrb[0].mxu0
      %v2275 = vadd.f32 0.0, %v2274
      %v2276 = vpop.f32.mrb[0].mxu0
      %v2277 = vpop.f32.mrb[0].mxu0
      %v2278 = vadd.f32 0.0, %v2277
      %v2279 = vpop.f32.mrb[0].mxu0
      %2280 = vmatprep.mubr.bf16.mxu0 %v1989
      %2281 = vmatmul.mubr.bf16.gmra.mrb[0].mxu0 %v1988
      %v2282 = vpop.f32.mrb[0].mxu0
      %v2283 = vadd.f32 0.0, %v2282
      %v2284 = vpop.f32.mrb[0].mxu0
      %v2285 = vpop.f32.mrb[0].mxu0
      %v2286 = vadd.f32 0.0, %v2285
      %v2287 = vpop.f32.mrb[0].mxu0
      %2288 = vmatprep.mubr.bf16.mxu0 %v1992
      %2289 = vmatmul.mubr.bf16.gmra.mrb[0].mxu0 %v1991
      %v2290 = vpop.f32.mrb[0].mxu0
      %v2291 = vadd.f32 0.0, %v2290
      %v2292 = vpop.f32.mrb[0].mxu0
      %v2293 = vpop.f32.mrb[0].mxu0
      %v2294 = vadd.f32 0.0, %v2293
      %v2295 = vpop.f32.mrb[0].mxu0
      %2296 = vmatprep.mubr.bf16.mxu0 %v1995
      %2297 = vmatmul.mubr.bf16.gmra.mrb[0].mxu0 %v1994
      %v2298 = vpop.f32.mrb[0].mxu0
      %v2299 = vadd.f32 0.0, %v2298
      %v2300 = vpop.f32.mrb[0].mxu0
      %v2301 = vpop.f32.mrb[0].mxu0
      %v2302 = vadd.f32 0.0, %v2301
      %v2303 = vpop.f32.mrb[0].mxu0
      %2304 = vmatprep.mubr.bf16.mxu0 %v1998
      %2305 = vmatmul.mubr.bf16.gmra.mrb[0].mxu0 %v1997
      %v2306 = vpop.f32.mrb[0].mxu0
      %v2307 = vadd.f32 0.0, %v2306
      %v2308 = vpop.f32.mrb[0].mxu0
      %v2309 = vpop.f32.mrb[0].mxu0
      %v2310 = vadd.f32 0.0, %v2309
      %v2311 = vpop.f32.mrb[0].mxu0
      %2312 = vmatprep.mubr.bf16.mxu0 %v2001
      %2313 = vmatmul.mubr.bf16.gmra.mrb[0].mxu0 %v2000
      %v2314 = vpop.f32.mrb[0].mxu0
      %v2315 = vadd.f32 0.0, %v2314
      %v2316 = vpop.f32.mrb[0].mxu0
      %v2317 = vpop.f32.mrb[0].mxu0
      %v2318 = vadd.f32 0.0, %v2317
      %v2319 = vpop.f32.mrb[0].mxu0
      %2320 = vmatprep.mubr.bf16.mxu0 %v2004
      %2321 = vmatmul.mubr.bf16.gmra.mrb[0].mxu0 %v2003
      %v2322 = vpop.f32.mrb[0].mxu0
      %v2323 = vadd.f32 0.0, %v2322
      %v2324 = vpop.f32.mrb[0].mxu0
      %v2325 = vpop.f32.mrb[0].mxu0
      %v2326 = vadd.f32 0.0, %v2325
      %v2327 = vpop.f32.mrb[0].mxu0
      %2328 = vmatprep.mubr.bf16.mxu0 %v2007
      %2329 = vmatmul.mubr.bf16.gmra.mrb[0].mxu0 %v2006
      %v2330 = vpop.f32.mrb[0].mxu0
      %v2331 = vadd.f32 0.0, %v2330
      %v2332 = vpop.f32.mrb[0].mxu0
      %v2333 = vpop.f32.mrb[0].mxu0
      %v2334 = vadd.f32 0.0, %v2333
      %v2335 = vpop.f32.mrb[0].mxu0
      %2336 = vmatprep.mubr.bf16.mxu0 %v2010
      %2337 = vmatmul.mubr.bf16.gmra.mrb[0].mxu0 %v2009
      %v2338 = vpop.f32.mrb[0].mxu0
      %v2339 = vadd.f32 0.0, %v2338
      %v2340 = vpop.f32.mrb[0].mxu0
      %v2341 = vpop.f32.mrb[0].mxu0
      %v2342 = vadd.f32 0.0, %v2341
      %v2343 = vpop.f32.mrb[0].mxu0
      %2344 = vmatprep.mubr.bf16.mxu0 %v2013
      %2345 = vmatmul.mubr.bf16.gmra.mrb[0].mxu0 %v2012
      %v2346 = vpop.f32.mrb[0].mxu0
      %v2347 = vadd.f32 0.0, %v2346
      %v2348 = vpop.f32.mrb[0].mxu0
      %v2349 = vpop.f32.mrb[0].mxu0
      %v2350 = vadd.f32 0.0, %v2349
      %v2351 = vpop.f32.mrb[0].mxu0
      %2352 = vmatprep.mubr.bf16.mxu0 %v2016
      %2353 = vmatmul.mubr.bf16.gmra.mrb[0].mxu0 %v2015
      %v2354 = vpop.f32.mrb[0].mxu0
      %v2355 = vadd.f32 0.0, %v2354
      %v2356 = vpop.f32.mrb[0].mxu0
      %v2357 = vpop.f32.mrb[0].mxu0
      %v2358 = vadd.f32 0.0, %v2357
      %v2359 = vpop.f32.mrb[0].mxu0
      %2360 = vmatprep.mubr.bf16.mxu0 %v2019
      %2361 = vmatmul.mubr.bf16.gmra.mrb[0].mxu0 %v2018
      %v2362 = vpop.f32.mrb[0].mxu0
      %v2363 = vadd.f32 0.0, %v2362
      %v2364 = vpop.f32.mrb[0].mxu0
      %v2365 = vpop.f32.mrb[0].mxu0
      %v2366 = vadd.f32 0.0, %v2365
      %v2367 = vpop.f32.mrb[0].mxu0
      %2368 = vmatprep.mubr.bf16.mxu0 %v2022
      %2369 = vmatmul.mubr.bf16.gmra.mrb[0].mxu0 %v2021
      %v2370 = vpop.f32.mrb[0].mxu0
      %v2371 = vadd.f32 0.0, %v2370
      %v2372 = vpop.f32.mrb[0].mxu0
      %v2373 = vpop.f32.mrb[0].mxu0
      %v2374 = vadd.f32 0.0, %v2373
      %v2375 = vpop.f32.mrb[0].mxu0
      %2376 = vdwg.mxu0
      %2377 = vmatprep.subr.bf16.mxu0 0
      %2378 = vmatpush1.bf16.msra.mxu0 %v2148
      %2379 = vmatprep.subr.bf16.mxu0 0
      %2380 = vmatpush1.bf16.msra.mxu0 %v2149
      %2381 = vmatprep.subr.bf16.mxu0 0
      %2382 = vmatpush1.bf16.msra.mxu0 0
      %2383 = vmatprep.subr.bf16.mxu0 0
      %2384 = vmatpush1.bf16.msra.mxu0 0
      %2385 = vmatprep.subr.bf16.mxu0 0
      %2386 = vmatpush1.bf16.msra.mxu0 0
      %2387 = vmatprep.subr.bf16.mxu0 0
      %2388 = vmatpush1.bf16.msra.mxu0 0
      %2389 = vmatprep.subr.bf16.mxu0 0
      %2390 = vmatpush1.bf16.msra.mxu0 0
      %2391 = vmatprep.subr.bf16.mxu0 0
      %2392 = vmatpush1.bf16.msra.mxu0 0
      %2393 = vmatprep.subr.bf16.mxu0 0
      %2394 = vmatpush1.bf16.msra.mxu0 0
      %2395 = vmatprep.subr.bf16.mxu0 0
      %2396 = vmatpush1.bf16.msra.mxu0 0
      %2397 = vmatprep.subr.bf16.mxu0 0
      %2398 = vmatpush1.bf16.msra.mxu0 0
      %2399 = vmatprep.subr.bf16.mxu0 0
      %2400 = vmatpush1.bf16.msra.mxu0 0
      %2401 = vmatprep.subr.bf16.mxu0 0
      %2402 = vmatpush1.bf16.msra.mxu0 0
      %2403 = vmatprep.subr.bf16.mxu0 0
      %2404 = vmatpush1.bf16.msra.mxu0 0
      %2405 = vmatprep.subr.bf16.mxu0 0
      %2406 = vmatpush1.bf16.msra.mxu0 0
      %2407 = vmatprep.subr.bf16.mxu0 0
      %2408 = vmatpush1.bf16.msra.mxu0 0
      %2409 = vmatprep.mubr.bf16.mxu0 0
      %2410 = vmatmul.mubr.bf16.gmra.mrb[0].mxu0 %v2169
      %v2411 = vpop.f32.mrb[0].mxu0
      %v2412 = vadd.f32 %v2251, %v2411
      %v2413 = vpop.f32.mrb[0].mxu0
      %v2414 = vpop.f32.mrb[0].mxu0
      %v2415 = vadd.f32 %v2254, %v2414
      %v2416 = vpop.f32.mrb[0].mxu0
      %2417 = vmatprep.mubr.bf16.mxu0 0
      %2418 = vmatmul.mubr.bf16.gmra.mrb[0].mxu0 %v2172
      %v2419 = vpop.f32.mrb[0].mxu0
      %v2420 = vadd.f32 %v2259, %v2419
      %v2421 = vpop.f32.mrb[0].mxu0
      %v2422 = vpop.f32.mrb[0].mxu0
      %v2423 = vadd.f32 %v2262, %v2422
      %v2424 = vpop.f32.mrb[0].mxu0
      %2425 = vmatprep.mubr.bf16.mxu0 0
      %2426 = vmatmul.mubr.bf16.gmra.mrb[0].mxu0 %v2175
      %v2427 = vpop.f32.mrb[0].mxu0
      %v2428 = vadd.f32 %v2267, %v2427
      %v2429 = vpop.f32.mrb[0].mxu0
      %v2430 = vpop.f32.mrb[0].mxu0
      %v2431 = vadd.f32 %v2270, %v2430
      %v2432 = vpop.f32.mrb[0].mxu0
      %2433 = vmatprep.mubr.bf16.mxu0 0
      %2434 = vmatmul.mubr.bf16.gmra.mrb[0].mxu0 %v2178
      %v2435 = vpop.f32.mrb[0].mxu0
      %v2436 = vadd.f32 %v2275, %v2435
      %v2437 = vpop.f32.mrb[0].mxu0
      %v2438 = vpop.f32.mrb[0].mxu0
      %v2439 = vadd.f32 %v2278, %v2438
      %v2440 = vpop.f32.mrb[0].mxu0
      %2441 = vmatprep.mubr.bf16.mxu0 0
      %2442 = vmatmul.mubr.bf16.gmra.mrb[0].mxu0 %v2181
      %v2443 = vpop.f32.mrb[0].mxu0
      %v2444 = vadd.f32 %v2283, %v2443
      %v2445 = vpop.f32.mrb[0].mxu0
      %v2446 = vpop.f32.mrb[0].mxu0
      %v2447 = vadd.f32 %v2286, %v2446
      %v2448 = vpop.f32.mrb[0].mxu0
      %2449 = vmatprep.mubr.bf16.mxu0 0
      %2450 = vmatmul.mubr.bf16.gmra.mrb[0].mxu0 %v2184
      %v2451 = vpop.f32.mrb[0].mxu0
      %v2452 = vadd.f32 %v2291, %v2451
      %v2453 = vpop.f32.mrb[0].mxu0
      %v2454 = vpop.f32.mrb[0].mxu0
      %v2455 = vadd.f32 %v2294, %v2454
      %v2456 = vpop.f32.mrb[0].mxu0
      %2457 = vmatprep.mubr.bf16.mxu0 0
      %2458 = vmatmul.mubr.bf16.gmra.mrb[0].mxu0 %v2187
      %v2459 = vpop.f32.mrb[0].mxu0
      %v2460 = vadd.f32 %v2299, %v2459
      %v2461 = vpop.f32.mrb[0].mxu0
      %v2462 = vpop.f32.mrb[0].mxu0
      %v2463 = vadd.f32 %v2302, %v2462
      %v2464 = vpop.f32.mrb[0].mxu0
      %2465 = vmatprep.mubr.bf16.mxu0 0
      %2466 = vmatmul.mubr.bf16.gmra.mrb[0].mxu0 %v2190
      %v2467 = vpop.f32.mrb[0].mxu0
      %v2468 = vadd.f32 %v2307, %v2467
      %v2469 = vpop.f32.mrb[0].mxu0
      %v2470 = vpop.f32.mrb[0].mxu0
      %v2471 = vadd.f32 %v2310, %v2470
      %v2472 = vpop.f32.mrb[0].mxu0
      %2473 = vmatprep.mubr.bf16.mxu0 0
      %2474 = vmatmul.mubr.bf16.gmra.mrb[0].mxu0 %v2193
      %v2475 = vpop.f32.mrb[0].mxu0
      %v2476 = vadd.f32 %v2315, %v2475
      %v2477 = vpop.f32.mrb[0].mxu0
      %v2478 = vpop.f32.mrb[0].mxu0
      %v2479 = vadd.f32 %v2318, %v2478
      %v2480 = vpop.f32.mrb[0].mxu0
      %2481 = vmatprep.mubr.bf16.mxu0 0
      %2482 = vmatmul.mubr.bf16.gmra.mrb[0].mxu0 %v2196
      %v2483 = vpop.f32.mrb[0].mxu0
      %v2484 = vadd.f32 %v2323, %v2483
      %v2485 = vpop.f32.mrb[0].mxu0
      %v2486 = vpop.f32.mrb[0].mxu0
      %v2487 = vadd.f32 %v2326, %v2486
      %v2488 = vpop.f32.mrb[0].mxu0
      %2489 = vmatprep.mubr.bf16.mxu0 0
      %2490 = vmatmul.mubr.bf16.gmra.mrb[0].mxu0 %v2199
      %v2491 = vpop.f32.mrb[0].mxu0
      %v2492 = vadd.f32 %v2331, %v2491
      %v2493 = vpop.f32.mrb[0].mxu0
      %v2494 = vpop.f32.mrb[0].mxu0
      %v2495 = vadd.f32 %v2334, %v2494
      %v2496 = vpop.f32.mrb[0].mxu0
      %2497 = vmatprep.mubr.bf16.mxu0 0
      %2498 = vmatmul.mubr.bf16.gmra.mrb[0].mxu0 %v2202
      %v2499 = vpop.f32.mrb[0].mxu0
      %v2500 = vadd.f32 %v2339, %v2499
      %v2501 = vpop.f32.mrb[0].mxu0
      %v2502 = vpop.f32.mrb[0].mxu0
      %v2503 = vadd.f32 %v2342, %v2502
      %v2504 = vpop.f32.mrb[0].mxu0
      %2505 = vmatprep.mubr.bf16.mxu0 0
      %2506 = vmatmul.mubr.bf16.gmra.mrb[0].mxu0 %v2205
      %v2507 = vpop.f32.mrb[0].mxu0
      %v2508 = vadd.f32 %v2347, %v2507
      %v2509 = vpop.f32.mrb[0].mxu0
      %v2510 = vpop.f32.mrb[0].mxu0
      %v2511 = vadd.f32 %v2350, %v2510
      %v2512 = vpop.f32.mrb[0].mxu0
      %2513 = vmatprep.mubr.bf16.mxu0 0
      %2514 = vmatmul.mubr.bf16.gmra.mrb[0].mxu0 %v2208
      %v2515 = vpop.f32.mrb[0].mxu0
      %v2516 = vadd.f32 %v2355, %v2515
      %v2517 = vpop.f32.mrb[0].mxu0
      %v2518 = vpop.f32.mrb[0].mxu0
      %v2519 = vadd.f32 %v2358, %v2518
      %v2520 = vpop.f32.mrb[0].mxu0
      %2521 = vmatprep.mubr.bf16.mxu0 0
      %2522 = vmatmul.mubr.bf16.gmra.mrb[0].mxu0 %v2211
      %v2523 = vpop.f32.mrb[0].mxu0
      %v2524 = vadd.f32 %v2363, %v2523
      %v2525 = vpop.f32.mrb[0].mxu0
      %v2526 = vpop.f32.mrb[0].mxu0
      %v2527 = vadd.f32 %v2366, %v2526
      %v2528 = vpop.f32.mrb[0].mxu0
      %2529 = vmatprep.mubr.bf16.mxu0 0
      %2530 = vmatmul.mubr.bf16.gmra.mrb[0].mxu0 %v2214
      %v2531 = vpop.f32.mrb[0].mxu0
      %v2532 = vadd.f32 %v2371, %v2531
      %v2533 = vpop.f32.mrb[0].mxu0
      %v2534 = vpop.f32.mrb[0].mxu0
      %v2535 = vadd.f32 %v2374, %v2534
      %v2536 = vpop.f32.mrb[0].mxu0
      %2537 = vdwg.mxu0
      %2538 = vst.msk [vmem:[%s278] sm:$0xff] %vm495, %v2412
      %2539 = vst.msk [vmem:[%s278 + $0x8] sm:$0xff] %vm495, %v2415
      %2540 = vst.msk [vmem:[%s278 + $0x10] sm:$0xff] %vm495, %v2420
      %2541 = vst.msk [vmem:[%s278 + $0x18] sm:$0xff] %vm495, %v2423
      %2542 = vst.msk [vmem:[%s278 + $0x20] sm:$0xff] %vm495, %v2428
      %2543 = vst.msk [vmem:[%s278 + $0x28] sm:$0xff] %vm495, %v2431
      %2544 = vst.msk [vmem:[%s278 + $0x30] sm:$0xff] %vm495, %v2436
      %2545 = vst.msk [vmem:[%s278 + $0x38] sm:$0xff] %vm495, %v2439
      %2546 = vst.msk [vmem:[%s278 + $0x40] sm:$0xff] %vm495, %v2444
      %2547 = vst.msk [vmem:[%s278 + $0x48] sm:$0xff] %vm495, %v2447
      %2548 = vst.msk [vmem:[%s278 + $0x50] sm:$0xff] %vm495, %v2452
      %2549 = vst.msk [vmem:[%s278 + $0x58] sm:$0xff] %vm495, %v2455
      %2550 = vst.msk [vmem:[%s278 + $0x60] sm:$0xff] %vm495, %v2460
      %2551 = vst.msk [vmem:[%s278 + $0x68] sm:$0xff] %vm495, %v2463
      %2552 = vst.msk [vmem:[%s278 + $0x70] sm:$0xff] %vm495, %v2468
      %2553 = vst.msk [vmem:[%s278 + $0x78] sm:$0xff] %vm495, %v2471
      %2554 = vst.msk [vmem:[%s278 + $0x80] sm:$0xff] %vm495, %v2476
      %2555 = vst.msk [vmem:[%s278 + $0x88] sm:$0xff] %vm495, %v2479
      %2556 = vst.msk [vmem:[%s278 + $0x90] sm:$0xff] %vm495, %v2484
      %2557 = vst.msk [vmem:[%s278 + $0x98] sm:$0xff] %vm495, %v2487
      %2558 = vst.msk [vmem:[%s278 + $0xa0] sm:$0xff] %vm495, %v2492
      %2559 = vst.msk [vmem:[%s278 + $0xa8] sm:$0xff] %vm495, %v2495
      %2560 = vst.msk [vmem:[%s278 + $0xb0] sm:$0xff] %vm495, %v2500
      %2561 = vst.msk [vmem:[%s278 + $0xb8] sm:$0xff] %vm495, %v2503
      %2562 = vst.msk [vmem:[%s278 + $0xc0] sm:$0xff] %vm495, %v2508
      %2563 = vst.msk [vmem:[%s278 + $0xc8] sm:$0xff] %vm495, %v2511
      %2564 = vst.msk [vmem:[%s278 + $0xd0] sm:$0xff] %vm495, %v2516
      %2565 = vst.msk [vmem:[%s278 + $0xd8] sm:$0xff] %vm495, %v2519
      %2566 = vst.msk [vmem:[%s278 + $0xe0] sm:$0xff] %vm495, %v2524
      %2567 = vst.msk [vmem:[%s278 + $0xe8] sm:$0xff] %vm495, %v2527
      %2568 = vst.msk [vmem:[%s278 + $0xf0] sm:$0xff] %vm495, %v2532
      %2569 = vst.msk [vmem:[%s278 + $0xf8] sm:$0xff] %vm495, %v2535
      %p2570 = scmp.lt.s32.totalorder %s18, 1
      %s2571 = scalar_select %p2570, %s18, 1
      %s2572 = smul.addr %s2571, 32
      %s2573 = smul.addr %s2572, 8
      %s2574 = scalar_lea.vmem %s7, %s2573
      // Predicated region
      $region49: #{tpu_custom_call.1} parent=47 // pred_check
        %p2575 = pneg %p188
      $region50: #{tpu_custom_call.1} parent=47 // pred_check_branch
        %2577 = sbr.rel (%p2575) target = $region52
      $region51: #{tpu_custom_call.1} parent=47 // pred_region
        _
      $region52: #{tpu_custom_call.1} parent=47 // pred_fallthru
        _
    $region48: #{tpu_custom_call.1} parent=5 // pred_fallthru
      _
    %p2578 = scmp.le.s32.totalorder 2, %s13
    // Predicated region
    $region53: #{tpu_custom_call.1} parent=5 // pred_check
      %p2579 = pneg %p2578
    $region54: #{tpu_custom_call.1} parent=5 // pred_check_branch
      %2581 = sbr.rel (%p2579) target = $region56
    $region55: #{tpu_custom_call.1} parent=5 // pred_region
      %s2582 = ssub.s32 %s13, 2
      // Predicated region
      $region57: #{tpu_custom_call.1} parent=55 // pred_check
        %p2583 = pneg %p194
      $region58: #{tpu_custom_call.1} parent=55 // pred_check_branch
        %2585 = sbr.rel (%p2583) target = $region60
      $region59: #{tpu_custom_call.1} parent=55 // pred_region
        %p2586 = scmp.lt.s32.totalorder %s19, 1
        %s2587 = scalar_select %p2586, %s19, 1
        %s2588 = smul.addr %s2587, 32
        %s2589 = smul.addr %s2588, 8
        %s2590 = scalar_lea.vmem %s7, %s2589
      $region60: #{tpu_custom_call.1} parent=55 // pred_fallthru
        _
    $region56: #{tpu_custom_call.1} parent=5 // pred_fallthru
      _
  $region6: #{tpu_custom_call.1} parent=0 // loop_footer
    %s17 = sadd.s32 1, %s13
  $region7: #{tpu_custom_call.1} parent=0 // loop_footer_branch
    %12 = sbr.rel target = $region3
  $region8: #{tpu_custom_call.1} parent=0 // loop_exit
    _

</llo_original>
